<compile_context>
chip_gen: v5e
topology: v5e:2x2
jax: 0.10.0
libtpu: 0.0.40
codegen_flags: <defaults>
</compile_context>

<pallas_src>
import functools

import jax
import jax.numpy as jnp
from jax.experimental import pallas as pl
from jax.experimental.pallas import tpu as pltpu


_VMEM_LIMIT_BYTES = 64 * 1024 * 1024   # explicit scoped-VMEM limit (all gens)
_VMEM_TILE_BUDGET = 40 * 1024 * 1024   # tile-sizing budget (headroom for scratch)


def _round_up(a: int, m: int) -> int:
    return -(-a // m) * m


def _pad2(a, rows, cols):
    return jnp.pad(a, ((0, rows - a.shape[0]), (0, cols - a.shape[1])))


def _vmem_bytes_estimate(tm, d_in, hid_p, d_emb_p, d_out_p):
    """Rough per-step VMEM footprint used to cap the batch tile size."""
    f32, bf16 = 4, 2
    est = 3 * 2 * tm * d_in * f32                    # x/y/z f32 tiles, double-buffered
    est += 2 * tm * d_out_p * f32                    # fused output tile, double-buffered
    est += d_in * hid_p * bf16                       # resident w1 (single-buffered)
    est += hid_p * d_emb_p * bf16                    # resident w2
    est += 8 * (hid_p + d_emb_p) * f32               # biases (sublane-padded)
    est += tm * d_in * bf16                          # in-kernel bf16 cast of one branch
    est += 2 * tm * hid_p * f32 + tm * hid_p * bf16  # hidden activations
    est += 2 * tm * d_emb_p * f32                    # second-dot results
    return est


def _pick_tm(b, d_in, hid_p, d_emb_p, d_out_p, block_rows):
    """Batch tile: >= 2 grid steps when possible, 16-row aligned, VMEM-capped."""
    if b <= 16:
        return b                                     # full-height block (== array dim)
    tm = min(_round_up(block_rows, 16), _round_up(pl.cdiv(b, 2), 16))
    while tm > 16 and _vmem_bytes_estimate(tm, d_in, hid_p, d_emb_p,
                                           d_out_p) > _VMEM_TILE_BUDGET:
        tm = _round_up(tm // 2, 16)
    return tm


def _resident_spec(shape, single_buffer):
    """Constant-index (VMEM-resident across the grid) weight/bias BlockSpec."""
    index_map = lambda *_: (0,) * len(shape)
    if single_buffer and hasattr(pl, "Buffered"):
        # Constant index_map -> double buffering would only waste VMEM.
        return pl.BlockSpec(shape, index_map, pipeline_mode=pl.Buffered(1))
    return pl.BlockSpec(shape, index_map)


def _triplet_embed_kernel(x_ref, y_ref, z_ref, w1_ref, b1_ref, w2_ref, b2_ref,
                          out_ref):
    """One batch tile of all three branches with shared resident weights.

    x/y/z : (tm, Din)        f32 (cast to the matmul dtype in-kernel)
    w1    : (Din, Hid_p)     bf16/f32      b1: (1, Hid_p)    f32
    w2    : (Hid_p, Demb_p)  bf16/f32      b2: (1, Demb_p)   f32
    out   : (tm, 3*Demb_p)   f32; bands [x | y | z], each 128-lane aligned.
    """
    w1 = w1_ref[...]
    b1 = b1_ref[...]
    w2 = w2_ref[...]
    b2 = b2_ref[...]
    d_emb_p = w2.shape[1]

    def embed(x_f32):
        x = x_f32.astype(w1.dtype)                   # in-kernel bf16 cast (no HBM pass)
        h = jnp.dot(x, w1, preferred_element_type=jnp.float32) + b1
        h = jnp.maximum(h, 0.0)
        return jnp.dot(h.astype(w2.dtype), w2,
                       preferred_element_type=jnp.float32) + b2

    out_ref[:, 0 * d_emb_p:1 * d_emb_p] = embed(x_ref[...]).astype(out_ref.dtype)
    out_ref[:, 1 * d_emb_p:2 * d_emb_p] = embed(y_ref[...]).astype(out_ref.dtype)
    out_ref[:, 2 * d_emb_p:3 * d_emb_p] = embed(z_ref[...]).astype(out_ref.dtype)


def init_embedding_params(key, d_in, hid, d_emb):
    """Deterministic parameter init (PyTorch-Linear-style uniform bounds)."""
    k1, k2, k3, k4 = jax.random.split(key, 4)
    s1 = 1.0 / jnp.sqrt(d_in)
    s2 = 1.0 / jnp.sqrt(hid)
    w1 = jax.random.uniform(k1, (d_in, hid), jnp.float32, -s1, s1)
    b1 = jax.random.uniform(k2, (1, hid), jnp.float32, -s1, s1)
    w2 = jax.random.uniform(k3, (hid, d_emb), jnp.float32, -s2, s2)
    b2 = jax.random.uniform(k4, (1, d_emb), jnp.float32, -s2, s2)
    return w1, b1, w2, b2


@functools.partial(jax.jit, static_argnums=(4, 5, 6))
def _triplet_forward_impl(x, y, z, params, block_rows, use_bf16,
                          single_buffer_weights):
    w1, b1, w2, b2 = params
    b = x.shape[0]
    d_in, hid = w1.shape
    d_emb = w2.shape[1]

    # Flatten NCHW -> (B, C*H*W), matching torch .view(B, -1). No pad, no cast:
    # the kernel reads the f32 rows directly (no extra HBM round-trip).
    xf = x.reshape(b, -1)
    yf = y.reshape(b, -1)
    zf = z.reshape(b, -1)
    assert xf.shape[1] == d_in

    dot_dtype = jnp.bfloat16 if use_bf16 else jnp.float32
    hid_p = _round_up(hid, 128)
    d_emb_p = _round_up(d_emb, 128)
    d_out_p = 3 * d_emb_p

    # Weights are tiny vs. activations: pad once (zero pad => exact math).
    w1_p = _pad2(w1, d_in, hid_p).astype(dot_dtype)
    b1_p = _pad2(b1, 1, hid_p)                       # bias stays f32
    w2_p = _pad2(w2, hid_p, d_emb_p).astype(dot_dtype)
    b2_p = _pad2(b2, 1, d_emb_p)                     # bias stays f32

    tm = _pick_tm(b, d_in, hid_p, d_emb_p, d_out_p, block_rows)
    grid = (pl.cdiv(b, tm),)

    row_spec = pl.BlockSpec((tm, d_in), lambda i: (i, 0))
    out_spec = pl.BlockSpec((tm, d_out_p), lambda i: (i, 0))

    out = pl.pallas_call(
        _triplet_embed_kernel,
        out_shape=jax.ShapeDtypeStruct((b, d_out_p), jnp.float32),
        grid=grid,
        in_specs=[
            row_spec, row_spec, row_spec,                              # x, y, z
            _resident_spec((d_in, hid_p), single_buffer_weights),      # w1
            _resident_spec((1, hid_p), single_buffer_weights),         # b1
            _resident_spec((hid_p, d_emb_p), single_buffer_weights),   # w2
            _resident_spec((1, d_emb_p), single_buffer_weights),       # b2
        ],
        out_specs=out_spec,
        compiler_params=pltpu.CompilerParams(
            dimension_semantics=("parallel",),
            vmem_limit_bytes=_VMEM_LIMIT_BYTES),
    )(xf, yf, zf, w1_p, b1_p, w2_p, b2_p)

    return (out[:, 0 * d_emb_p:0 * d_emb_p + d_emb],
            out[:, 1 * d_emb_p:1 * d_emb_p + d_emb],
            out[:, 2 * d_emb_p:2 * d_emb_p + d_emb])


def triplet_net_forward(x, y, z, params, *, block_rows=512, use_bf16=True):
    """TripletNet.forward: shared-weight embedding of x, y, z in one pallas_call."""
    try:
        return _triplet_forward_impl(x, y, z, params, block_rows, use_bf16, True)
    except Exception:
        # Compatibility fallback (older jax without BlockSpec pipeline_mode /
        # single-buffered residents): identical math, default double buffering.
        return _triplet_forward_impl(x, y, z, params, block_rows, use_bf16, False)


def reference_forward(x, y, z, params, *, use_bf16=True):
    """Plain-JAX reference with matched matmul dtypes for the correctness check."""
    w1, b1, w2, b2 = params
    dt = jnp.bfloat16 if use_bf16 else jnp.float32

    def embed(a):
        a = a.reshape(a.shape[0], -1).astype(dt)
        h = jnp.dot(a, w1.astype(dt), preferred_element_type=jnp.float32) + b1
        h = jnp.maximum(h, 0.0)
        return jnp.dot(h.astype(dt), w2.astype(dt),
                       preferred_element_type=jnp.float32) + b2

    return embed(x), embed(y), embed(z)


if __name__ == "__main__":
    B, C, H, W = 2, 4, 16, 16
    D_IN, HID, D_EMB = C * H * W, 96, 32   # HID=96 exercises the hid->128 weight pad

    key = jax.random.PRNGKey(0)
    kx, ky, kz, kp = jax.random.split(key, 4)
    x = jax.random.normal(kx, (B, C, H, W), jnp.float32)
    y = jax.random.normal(ky, (B, C, H, W), jnp.float32)
    z = jax.random.normal(kz, (B, C, H, W), jnp.float32)
    params = init_embedding_params(kp, D_IN, HID, D_EMB)

    ex, ey, ez = triplet_net_forward(x, y, z, params)
    jax.block_until_ready((ex, ey, ez))

    rx, ry, rz = reference_forward(x, y, z, params)
    assert ex.shape == (B, D_EMB) and ey.shape == (B, D_EMB) and ez.shape == (B, D_EMB)
    assert jnp.allclose(ex, rx, atol=1e-2, rtol=1e-2)
    assert jnp.allclose(ey, ry, atol=1e-2, rtol=1e-2)
    assert jnp.allclose(ez, rz, atol=1e-2, rtol=1e-2)

    # Second config: batch large enough to exercise the tiled (>=2 grid steps)
    # path with a ragged last block (no batch padding in the wrapper).
    B2 = 40
    k2x, k2y, k2z = jax.random.split(jax.random.PRNGKey(1), 3)
    x2 = jax.random.normal(k2x, (B2, C, H, W), jnp.float32)
    y2 = jax.random.normal(k2y, (B2, C, H, W), jnp.float32)
    z2 = jax.random.normal(k2z, (B2, C, H, W), jnp.float32)
    e2x, e2y, e2z = triplet_net_forward(x2, y2, z2, params)
    jax.block_until_ready((e2x, e2y, e2z))
    r2x, r2y, r2z = reference_forward(x2, y2, z2, params)
    assert e2x.shape == (B2, D_EMB)
    assert jnp.allclose(e2x, r2x, atol=1e-2, rtol=1e-2)
    assert jnp.allclose(e2y, r2y, atol=1e-2, rtol=1e-2)
    assert jnp.allclose(e2z, r2z, atol=1e-2, rtol=1e-2)

    print("KERNEL_OK")
</pallas_src>

<mosaic_0001>
module attributes {stable_mosaic.version = 11 : i64} {
  func.func @_triplet_embed_kernel(%arg0: i32, %arg1: memref<2x1024xf32, #tpu.memory_space<vmem>>, %arg2: memref<2x1024xf32, #tpu.memory_space<vmem>>, %arg3: memref<2x1024xf32, #tpu.memory_space<vmem>>, %arg4: memref<1024x128xbf16, #tpu.memory_space<vmem>>, %arg5: memref<1x128xf32, #tpu.memory_space<vmem>>, %arg6: memref<128x128xbf16, #tpu.memory_space<vmem>>, %arg7: memref<1x128xf32, #tpu.memory_space<vmem>>, %arg8: memref<2x384xf32, #tpu.memory_space<vmem>>) attributes {dimension_semantics = [#tpu.dimension_semantics<parallel>], iteration_bounds = array<i64: 1>, scalar_prefetch = 0 : i64, scratch_operands = 0 : i64, tpu.core_type = #tpu.core_type<tc>, window_params = [{transform_indices = @transform_0, window_bounds = array<i64: 2, 1024>}, {transform_indices = @transform_1, window_bounds = array<i64: 2, 1024>}, {transform_indices = @transform_2, window_bounds = array<i64: 2, 1024>}, {pipeline_mode = #tpu.pipeline_mode<synchronous>, transform_indices = @transform_3, window_bounds = array<i64: 1024, 128>}, {pipeline_mode = #tpu.pipeline_mode<synchronous>, transform_indices = @transform_4, window_bounds = array<i64: 1, 128>}, {pipeline_mode = #tpu.pipeline_mode<synchronous>, transform_indices = @transform_5, window_bounds = array<i64: 128, 128>}, {pipeline_mode = #tpu.pipeline_mode<synchronous>, transform_indices = @transform_6, window_bounds = array<i64: 1, 128>}, {transform_indices = @transform_7, window_bounds = array<i64: 2, 384>}]} {
    %c0 = arith.constant 0 : index
    %c0_0 = arith.constant 0 : index
    %0 = vector.load %arg4[%c0, %c0_0] : memref<1024x128xbf16, #tpu.memory_space<vmem>>, vector<1024x128xbf16>
    %c0_1 = arith.constant 0 : index
    %c0_2 = arith.constant 0 : index
    %1 = vector.load %arg5[%c0_1, %c0_2] : memref<1x128xf32, #tpu.memory_space<vmem>>, vector<1x128xf32>
    %c0_3 = arith.constant 0 : index
    %c0_4 = arith.constant 0 : index
    %2 = vector.load %arg6[%c0_3, %c0_4] : memref<128x128xbf16, #tpu.memory_space<vmem>>, vector<128x128xbf16>
    %c0_5 = arith.constant 0 : index
    %c0_6 = arith.constant 0 : index
    %3 = vector.load %arg7[%c0_5, %c0_6] : memref<1x128xf32, #tpu.memory_space<vmem>>, vector<1x128xf32>
    %c0_7 = arith.constant 0 : index
    %c0_8 = arith.constant 0 : index
    %4 = vector.load %arg1[%c0_7, %c0_8] : memref<2x1024xf32, #tpu.memory_space<vmem>>, vector<2x1024xf32>
    %5 = arith.truncf %4 : vector<2x1024xf32> to vector<2x1024xbf16>
    %cst = arith.constant dense<0.000000e+00> : vector<2x128xf32>
    %6 = tpu.matmul %5, %0, %cst {dimension_numbers = #tpu.dot_dimension_numbers<[1], [0], [0], [1], [0, 0, 1, 1], [], []>} : vector<2x1024xbf16>, vector<1024x128xbf16>, vector<2x128xf32> -> vector<2x128xf32>
    %7 = vector.broadcast %1 : vector<1x128xf32> to vector<2x128xf32>
    %8 = arith.addf %6, %7 : vector<2x128xf32>
    %cst_9 = arith.constant 0.000000e+00 : f32
    %9 = vector.broadcast %cst_9 : f32 to vector<2x128xf32>
    %10 = arith.maximumf %8, %9 : vector<2x128xf32>
    %11 = arith.truncf %10 : vector<2x128xf32> to vector<2x128xbf16>
    %cst_10 = arith.constant dense<0.000000e+00> : vector<2x128xf32>
    %12 = tpu.matmul %11, %2, %cst_10 {dimension_numbers = #tpu.dot_dimension_numbers<[1], [0], [0], [1], [0, 0, 1, 1], [], []>} : vector<2x128xbf16>, vector<128x128xbf16>, vector<2x128xf32> -> vector<2x128xf32>
    %13 = vector.broadcast %3 : vector<1x128xf32> to vector<2x128xf32>
    %14 = arith.addf %12, %13 : vector<2x128xf32>
    %c0_11 = arith.constant 0 : index
    %c0_12 = arith.constant 0 : index
    %15 = vector.load %arg8[%c0_11, %c0_12] : memref<2x384xf32, #tpu.memory_space<vmem>>, vector<2x128xf32>
    tpu.vector_store %arg8[%c0_11, %c0_12], %14 {strides = array<i32>} : memref<2x384xf32, #tpu.memory_space<vmem>>, vector<2x128xf32>,
    %c0_13 = arith.constant 0 : index
    %c0_14 = arith.constant 0 : index
    %16 = vector.load %arg2[%c0_13, %c0_14] : memref<2x1024xf32, #tpu.memory_space<vmem>>, vector<2x1024xf32>
    %17 = arith.truncf %16 : vector<2x1024xf32> to vector<2x1024xbf16>
    %cst_15 = arith.constant dense<0.000000e+00> : vector<2x128xf32>
    %18 = tpu.matmul %17, %0, %cst_15 {dimension_numbers = #tpu.dot_dimension_numbers<[1], [0], [0], [1], [0, 0, 1, 1], [], []>} : vector<2x1024xbf16>, vector<1024x128xbf16>, vector<2x128xf32> -> vector<2x128xf32>
    %19 = vector.broadcast %1 : vector<1x128xf32> to vector<2x128xf32>
    %20 = arith.addf %18, %19 : vector<2x128xf32>
    %cst_16 = arith.constant 0.000000e+00 : f32
    %21 = vector.broadcast %cst_16 : f32 to vector<2x128xf32>
    %22 = arith.maximumf %20, %21 : vector<2x128xf32>
    %23 = arith.truncf %22 : vector<2x128xf32> to vector<2x128xbf16>
    %cst_17 = arith.constant dense<0.000000e+00> : vector<2x128xf32>
    %24 = tpu.matmul %23, %2, %cst_17 {dimension_numbers = #tpu.dot_dimension_numbers<[1], [0], [0], [1], [0, 0, 1, 1], [], []>} : vector<2x128xbf16>, vector<128x128xbf16>, vector<2x128xf32> -> vector<2x128xf32>
    %25 = vector.broadcast %3 : vector<1x128xf32> to vector<2x128xf32>
    %26 = arith.addf %24, %25 : vector<2x128xf32>
    %c0_18 = arith.constant 0 : index
    %c128 = arith.constant 128 : index
    %27 = vector.load %arg8[%c0_18, %c128] : memref<2x384xf32, #tpu.memory_space<vmem>>, vector<2x128xf32>
    tpu.vector_store %arg8[%c0_18, %c128], %26 {strides = array<i32>} : memref<2x384xf32, #tpu.memory_space<vmem>>, vector<2x128xf32>,
    %c0_19 = arith.constant 0 : index
    %c0_20 = arith.constant 0 : index
    %28 = vector.load %arg3[%c0_19, %c0_20] : memref<2x1024xf32, #tpu.memory_space<vmem>>, vector<2x1024xf32>
    %29 = arith.truncf %28 : vector<2x1024xf32> to vector<2x1024xbf16>
    %cst_21 = arith.constant dense<0.000000e+00> : vector<2x128xf32>
    %30 = tpu.matmul %29, %0, %cst_21 {dimension_numbers = #tpu.dot_dimension_numbers<[1], [0], [0], [1], [0, 0, 1, 1], [], []>} : vector<2x1024xbf16>, vector<1024x128xbf16>, vector<2x128xf32> -> vector<2x128xf32>
    %31 = vector.broadcast %1 : vector<1x128xf32> to vector<2x128xf32>
    %32 = arith.addf %30, %31 : vector<2x128xf32>
    %cst_22 = arith.constant 0.000000e+00 : f32
    %33 = vector.broadcast %cst_22 : f32 to vector<2x128xf32>
    %34 = arith.maximumf %32, %33 : vector<2x128xf32>
    %35 = arith.truncf %34 : vector<2x128xf32> to vector<2x128xbf16>
    %cst_23 = arith.constant dense<0.000000e+00> : vector<2x128xf32>
    %36 = tpu.matmul %35, %2, %cst_23 {dimension_numbers = #tpu.dot_dimension_numbers<[1], [0], [0], [1], [0, 0, 1, 1], [], []>} : vector<2x128xbf16>, vector<128x128xbf16>, vector<2x128xf32> -> vector<2x128xf32>
    %37 = vector.broadcast %3 : vector<1x128xf32> to vector<2x128xf32>
    %38 = arith.addf %36, %37 : vector<2x128xf32>
    %c0_24 = arith.constant 0 : index
    %c256 = arith.constant 256 : index
    %39 = vector.load %arg8[%c0_24, %c256] : memref<2x384xf32, #tpu.memory_space<vmem>>, vector<2x128xf32>
    tpu.vector_store %arg8[%c0_24, %c256], %38 {strides = array<i32>} : memref<2x384xf32, #tpu.memory_space<vmem>>, vector<2x128xf32>,
    return
  }
  func.func @transform_0(%arg0: i32) -> (i32, i32) {
    %c0_i32 = arith.constant 0 : i32
    %c0_i32_0 = arith.constant 0 : i32
    return %arg0, %c0_i32 : i32, i32
  }
  func.func @transform_1(%arg0: i32) -> (i32, i32) {
    %c0_i32 = arith.constant 0 : i32
    %c0_i32_0 = arith.constant 0 : i32
    return %arg0, %c0_i32 : i32, i32
  }
  func.func @transform_2(%arg0: i32) -> (i32, i32) {
    %c0_i32 = arith.constant 0 : i32
    %c0_i32_0 = arith.constant 0 : i32
    return %arg0, %c0_i32 : i32, i32
  }
  func.func @transform_3(%arg0: i32) -> (i32, i32) {
    %c0_i32 = arith.constant 0 : i32
    %c0_i32_0 = arith.constant 0 : i32
    %c0_i32_1 = arith.constant 0 : i32
    return %c0_i32, %c0_i32_0 : i32, i32
  }
  func.func @transform_4(%arg0: i32) -> (i32, i32) {
    %c0_i32 = arith.constant 0 : i32
    %c0_i32_0 = arith.constant 0 : i32
    %c0_i32_1 = arith.constant 0 : i32
    return %c0_i32, %c0_i32_0 : i32, i32
  }
  func.func @transform_5(%arg0: i32) -> (i32, i32) {
    %c0_i32 = arith.constant 0 : i32
    %c0_i32_0 = arith.constant 0 : i32
    %c0_i32_1 = arith.constant 0 : i32
    return %c0_i32, %c0_i32_0 : i32, i32
  }
  func.func @transform_6(%arg0: i32) -> (i32, i32) {
    %c0_i32 = arith.constant 0 : i32
    %c0_i32_0 = arith.constant 0 : i32
    %c0_i32_1 = arith.constant 0 : i32
    return %c0_i32, %c0_i32_0 : i32, i32
  }
  func.func @transform_7(%arg0: i32) -> (i32, i32) {
    %c0_i32 = arith.constant 0 : i32
    %c0_i32_0 = arith.constant 0 : i32
    return %arg0, %c0_i32 : i32, i32
  }
}

module attributes {stable_mosaic.version = 11 : i64} {
  func.func @_triplet_embed_kernel(%arg0: i32, %arg1: memref<2x1024xf32, #tpu.memory_space<vmem>>, %arg2: memref<2x1024xf32, #tpu.memory_space<vmem>>, %arg3: memref<2x1024xf32, #tpu.memory_space<vmem>>, %arg4: memref<1024x128xbf16, #tpu.memory_space<vmem>>, %arg5: memref<1x128xf32, #tpu.memory_space<vmem>>, %arg6: memref<128x128xbf16, #tpu.memory_space<vmem>>, %arg7: memref<1x128xf32, #tpu.memory_space<vmem>>, %arg8: memref<2x384xf32, #tpu.memory_space<vmem>>) attributes {dimension_semantics = [#tpu.dimension_semantics<parallel>], iteration_bounds = array<i64: 1>, scalar_prefetch = 0 : i64, scratch_operands = 0 : i64, tpu.core_type = #tpu.core_type<tc>, window_params = [{transform_indices = @transform_0, window_bounds = array<i64: 2, 1024>}, {transform_indices = @transform_1, window_bounds = array<i64: 2, 1024>}, {transform_indices = @transform_2, window_bounds = array<i64: 2, 1024>}, {pipeline_mode = #tpu.pipeline_mode<synchronous>, transform_indices = @transform_3, window_bounds = array<i64: 1024, 128>}, {pipeline_mode = #tpu.pipeline_mode<synchronous>, transform_indices = @transform_4, window_bounds = array<i64: 1, 128>}, {pipeline_mode = #tpu.pipeline_mode<synchronous>, transform_indices = @transform_5, window_bounds = array<i64: 128, 128>}, {pipeline_mode = #tpu.pipeline_mode<synchronous>, transform_indices = @transform_6, window_bounds = array<i64: 1, 128>}, {transform_indices = @transform_7, window_bounds = array<i64: 2, 384>}]} {
    %c0 = arith.constant 0 : index
    %c0_0 = arith.constant 0 : index
    %0 = vector.load %arg4[%c0, %c0_0] : memref<1024x128xbf16, #tpu.memory_space<vmem>>, vector<1024x128xbf16>
    %c0_1 = arith.constant 0 : index
    %c0_2 = arith.constant 0 : index
    %1 = vector.load %arg5[%c0_1, %c0_2] : memref<1x128xf32, #tpu.memory_space<vmem>>, vector<1x128xf32>
    %c0_3 = arith.constant 0 : index
    %c0_4 = arith.constant 0 : index
    %2 = vector.load %arg6[%c0_3, %c0_4] : memref<128x128xbf16, #tpu.memory_space<vmem>>, vector<128x128xbf16>
    %c0_5 = arith.constant 0 : index
    %c0_6 = arith.constant 0 : index
    %3 = vector.load %arg7[%c0_5, %c0_6] : memref<1x128xf32, #tpu.memory_space<vmem>>, vector<1x128xf32>
    %c0_7 = arith.constant 0 : index
    %c0_8 = arith.constant 0 : index
    %4 = vector.load %arg1[%c0_7, %c0_8] : memref<2x1024xf32, #tpu.memory_space<vmem>>, vector<2x1024xf32>
    %5 = arith.truncf %4 : vector<2x1024xf32> to vector<2x1024xbf16>
    %cst = arith.constant dense<0.000000e+00> : vector<2x128xf32>
    %6 = tpu.matmul %5, %0, %cst {dimension_numbers = #tpu.dot_dimension_numbers<[1], [0], [0], [1], [0, 0, 1, 1], [], []>} : vector<2x1024xbf16>, vector<1024x128xbf16>, vector<2x128xf32> -> vector<2x128xf32>
    %7 = vector.broadcast %1 : vector<1x128xf32> to vector<2x128xf32>
    %8 = arith.addf %6, %7 : vector<2x128xf32>
    %cst_9 = arith.constant 0.000000e+00 : f32
    %9 = vector.broadcast %cst_9 : f32 to vector<2x128xf32>
    %10 = arith.maximumf %8, %9 : vector<2x128xf32>
    %11 = arith.truncf %10 : vector<2x128xf32> to vector<2x128xbf16>
    %cst_10 = arith.constant dense<0.000000e+00> : vector<2x128xf32>
    %12 = tpu.matmul %11, %2, %cst_10 {dimension_numbers = #tpu.dot_dimension_numbers<[1], [0], [0], [1], [0, 0, 1, 1], [], []>} : vector<2x128xbf16>, vector<128x128xbf16>, vector<2x128xf32> -> vector<2x128xf32>
    %13 = vector.broadcast %3 : vector<1x128xf32> to vector<2x128xf32>
    %14 = arith.addf %12, %13 : vector<2x128xf32>
    %c0_11 = arith.constant 0 : index
    %c0_12 = arith.constant 0 : index
    %15 = vector.load %arg8[%c0_11, %c0_12] : memref<2x384xf32, #tpu.memory_space<vmem>>, vector<2x128xf32>
    tpu.vector_store %arg8[%c0_11, %c0_12], %14 {strides = array<i32>} : memref<2x384xf32, #tpu.memory_space<vmem>>, vector<2x128xf32>,
    %c0_13 = arith.constant 0 : index
    %c0_14 = arith.constant 0 : index
    %16 = vector.load %arg2[%c0_13, %c0_14] : memref<2x1024xf32, #tpu.memory_space<vmem>>, vector<2x1024xf32>
    %17 = arith.truncf %16 : vector<2x1024xf32> to vector<2x1024xbf16>
    %cst_15 = arith.constant dense<0.000000e+00> : vector<2x128xf32>
    %18 = tpu.matmul %17, %0, %cst_15 {dimension_numbers = #tpu.dot_dimension_numbers<[1], [0], [0], [1], [0, 0, 1, 1], [], []>} : vector<2x1024xbf16>, vector<1024x128xbf16>, vector<2x128xf32> -> vector<2x128xf32>
    %19 = vector.broadcast %1 : vector<1x128xf32> to vector<2x128xf32>
    %20 = arith.addf %18, %19 : vector<2x128xf32>
    %cst_16 = arith.constant 0.000000e+00 : f32
    %21 = vector.broadcast %cst_16 : f32 to vector<2x128xf32>
    %22 = arith.maximumf %20, %21 : vector<2x128xf32>
    %23 = arith.truncf %22 : vector<2x128xf32> to vector<2x128xbf16>
    %cst_17 = arith.constant dense<0.000000e+00> : vector<2x128xf32>
    %24 = tpu.matmul %23, %2, %cst_17 {dimension_numbers = #tpu.dot_dimension_numbers<[1], [0], [0], [1], [0, 0, 1, 1], [], []>} : vector<2x128xbf16>, vector<128x128xbf16>, vector<2x128xf32> -> vector<2x128xf32>
    %25 = vector.broadcast %3 : vector<1x128xf32> to vector<2x128xf32>
    %26 = arith.addf %24, %25 : vector<2x128xf32>
    %c0_18 = arith.constant 0 : index
    %c128 = arith.constant 128 : index
    %27 = vector.load %arg8[%c0_18, %c128] : memref<2x384xf32, #tpu.memory_space<vmem>>, vector<2x128xf32>
    tpu.vector_store %arg8[%c0_18, %c128], %26 {strides = array<i32>} : memref<2x384xf32, #tpu.memory_space<vmem>>, vector<2x128xf32>,
    %c0_19 = arith.constant 0 : index
    %c0_20 = arith.constant 0 : index
    %28 = vector.load %arg3[%c0_19, %c0_20] : memref<2x1024xf32, #tpu.memory_space<vmem>>, vector<2x1024xf32>
    %29 = arith.truncf %28 : vector<2x1024xf32> to vector<2x1024xbf16>
    %cst_21 = arith.constant dense<0.000000e+00> : vector<2x128xf32>
    %30 = tpu.matmul %29, %0, %cst_21 {dimension_numbers = #tpu.dot_dimension_numbers<[1], [0], [0], [1], [0, 0, 1, 1], [], []>} : vector<2x1024xbf16>, vector<1024x128xbf16>, vector<2x128xf32> -> vector<2x128xf32>
    %31 = vector.broadcast %1 : vector<1x128xf32> to vector<2x128xf32>
    %32 = arith.addf %30, %31 : vector<2x128xf32>
    %cst_22 = arith.constant 0.000000e+00 : f32
    %33 = vector.broadcast %cst_22 : f32 to vector<2x128xf32>
    %34 = arith.maximumf %32, %33 : vector<2x128xf32>
    %35 = arith.truncf %34 : vector<2x128xf32> to vector<2x128xbf16>
    %cst_23 = arith.constant dense<0.000000e+00> : vector<2x128xf32>
    %36 = tpu.matmul %35, %2, %cst_23 {dimension_numbers = #tpu.dot_dimension_numbers<[1], [0], [0], [1], [0, 0, 1, 1], [], []>} : vector<2x128xbf16>, vector<128x128xbf16>, vector<2x128xf32> -> vector<2x128xf32>
    %37 = vector.broadcast %3 : vector<1x128xf32> to vector<2x128xf32>
    %38 = arith.addf %36, %37 : vector<2x128xf32>
    %c0_24 = arith.constant 0 : index
    %c256 = arith.constant 256 : index
    %39 = vector.load %arg8[%c0_24, %c256] : memref<2x384xf32, #tpu.memory_space<vmem>>, vector<2x128xf32>
    tpu.vector_store %arg8[%c0_24, %c256], %38 {strides = array<i32>} : memref<2x384xf32, #tpu.memory_space<vmem>>, vector<2x128xf32>,
    return
  }
  func.func @transform_0(%arg0: i32) -> (i32, i32) {
    %c0_i32 = arith.constant 0 : i32
    %c0_i32_0 = arith.constant 0 : i32
    return %arg0, %c0_i32 : i32, i32
  }
  func.func @transform_1(%arg0: i32) -> (i32, i32) {
    %c0_i32 = arith.constant 0 : i32
    %c0_i32_0 = arith.constant 0 : i32
    return %arg0, %c0_i32 : i32, i32
  }
  func.func @transform_2(%arg0: i32) -> (i32, i32) {
    %c0_i32 = arith.constant 0 : i32
    %c0_i32_0 = arith.constant 0 : i32
    return %arg0, %c0_i32 : i32, i32
  }
  func.func @transform_3(%arg0: i32) -> (i32, i32) {
    %c0_i32 = arith.constant 0 : i32
    %c0_i32_0 = arith.constant 0 : i32
    %c0_i32_1 = arith.constant 0 : i32
    return %c0_i32, %c0_i32_0 : i32, i32
  }
  func.func @transform_4(%arg0: i32) -> (i32, i32) {
    %c0_i32 = arith.constant 0 : i32
    %c0_i32_0 = arith.constant 0 : i32
    %c0_i32_1 = arith.constant 0 : i32
    return %c0_i32, %c0_i32_0 : i32, i32
  }
  func.func @transform_5(%arg0: i32) -> (i32, i32) {
    %c0_i32 = arith.constant 0 : i32
    %c0_i32_0 = arith.constant 0 : i32
    %c0_i32_1 = arith.constant 0 : i32
    return %c0_i32, %c0_i32_0 : i32, i32
  }
  func.func @transform_6(%arg0: i32) -> (i32, i32) {
    %c0_i32 = arith.constant 0 : i32
    %c0_i32_0 = arith.constant 0 : i32
    %c0_i32_1 = arith.constant 0 : i32
    return %c0_i32, %c0_i32_0 : i32, i32
  }
  func.func @transform_7(%arg0: i32) -> (i32, i32) {
    %c0_i32 = arith.constant 0 : i32
    %c0_i32_0 = arith.constant 0 : i32
    return %arg0, %c0_i32 : i32, i32
  }
}

</mosaic_0001>

<llo_original>
// kernel: _triplet_forward_impl.1
$region0: #{_triplet_forward_impl.1}
  #allocation0 [shape = 'u32[]', space=smem, size = 0x4, offset = 0x4, fixed_abs, tag = 'smem constant byte address 0x4 - core index']
  #allocation1 [shape = 'u32[72,128]{1,0:T(1,128)}', space=vmem, size = 0x9000, scoped, tag = 'internal scratch']
  %s0 = inlined_call_operand.vmem [shape: f32[2,1024], index: 0, kind: input, shape index: {}]
  %s1 = inlined_call_operand.vmem [shape: f32[2,1024], index: 1, kind: input, shape index: {}]
  %s2 = inlined_call_operand.vmem [shape: f32[2,1024], index: 2, kind: input, shape index: {}]
  %s3 = inlined_call_operand.vmem [shape: bf16[1024,128], index: 3, kind: input, shape index: {}]
  %s4 = inlined_call_operand.vmem [shape: f32[1,128], index: 4, kind: input, shape index: {}]
  %s5 = inlined_call_operand.vmem [shape: bf16[128,128], index: 5, kind: input, shape index: {}]
  %s6 = inlined_call_operand.vmem [shape: f32[1,128], index: 6, kind: input, shape index: {}]
  %s7 = inlined_call_operand.vmem [shape: f32[2,384], index: 7, kind: output, shape index: {}]
  %s8 = sld [smem:[#allocation0]]
  $region38: #{_triplet_forward_impl.1} parent=0
    _
  %s10 = ssub.s32 1, %s8
  %s11 = scalar_select 0, %s10, %s8
  // Predicated region
  $region2: #{_triplet_forward_impl.1} parent=0 // pred_check
    _
  $region3: #{_triplet_forward_impl.1} parent=0 // pred_check_branch
    %13 = sbr.rel (0) target = $region5
  $region4: #{_triplet_forward_impl.1} parent=0 // pred_region
    _
  $region5: #{_triplet_forward_impl.1} parent=0 // pred_fallthru
    _
  // Predicated region
  $region6: #{_triplet_forward_impl.1} parent=0 // pred_check
    _
  $region7: #{_triplet_forward_impl.1} parent=0 // pred_check_branch
    %15 = sbr.rel (0) target = $region9
  $region8: #{_triplet_forward_impl.1} parent=0 // pred_region
    _
  $region9: #{_triplet_forward_impl.1} parent=0 // pred_fallthru
    _
  // Predicated region
  $region10: #{_triplet_forward_impl.1} parent=0 // pred_check
    _
  $region11: #{_triplet_forward_impl.1} parent=0 // pred_check_branch
    %17 = sbr.rel (0) target = $region13
  $region12: #{_triplet_forward_impl.1} parent=0 // pred_region
    _
  $region13: #{_triplet_forward_impl.1} parent=0 // pred_fallthru
    _
  // Predicated region
  $region14: #{_triplet_forward_impl.1} parent=0 // pred_check
    _
  $region15: #{_triplet_forward_impl.1} parent=0 // pred_check_branch
    %19 = sbr.rel (0) target = $region17
  $region16: #{_triplet_forward_impl.1} parent=0 // pred_region
    _
  $region17: #{_triplet_forward_impl.1} parent=0 // pred_fallthru
    _
  // Predicated region
  $region18: #{_triplet_forward_impl.1} parent=0 // pred_check
    _
  $region19: #{_triplet_forward_impl.1} parent=0 // pred_check_branch
    %21 = sbr.rel (0) target = $region21
  $region20: #{_triplet_forward_impl.1} parent=0 // pred_region
    _
  $region21: #{_triplet_forward_impl.1} parent=0 // pred_fallthru
    _
  // Predicated region
  $region22: #{_triplet_forward_impl.1} parent=0 // pred_check
    _
  $region23: #{_triplet_forward_impl.1} parent=0 // pred_check_branch
    %23 = sbr.rel (0) target = $region25
  $region24: #{_triplet_forward_impl.1} parent=0 // pred_region
    _
  $region25: #{_triplet_forward_impl.1} parent=0 // pred_fallthru
    _
  // Predicated region
  $region26: #{_triplet_forward_impl.1} parent=0 // pred_check
    _
  $region27: #{_triplet_forward_impl.1} parent=0 // pred_check_branch
    %25 = sbr.rel (0) target = $region29
  $region28: #{_triplet_forward_impl.1} parent=0 // pred_region
    _
  $region29: #{_triplet_forward_impl.1} parent=0 // pred_fallthru
    _
  %v26 = vld [vmem:[%s3] sm:$0xf]
  %v27 = vld [vmem:[%s3 + $0x4] sm:$0xf]
  %v28 = vld [vmem:[%s3 + $0x8] sm:$0xf]
  %v29 = vld [vmem:[%s3 + $0xc] sm:$0xf]
  %v30 = vld [vmem:[%s3 + $0x10] sm:$0xf]
  %v31 = vld [vmem:[%s3 + $0x14] sm:$0xf]
  %v32 = vld [vmem:[%s3 + $0x18] sm:$0xf]
  %v33 = vld [vmem:[%s3 + $0x1c] sm:$0xf]
  %v34 = vld [vmem:[%s3 + $0x20] sm:$0xf]
  %v35 = vld [vmem:[%s3 + $0x24] sm:$0xf]
  %v36 = vld [vmem:[%s3 + $0x28] sm:$0xf]
  %v37 = vld [vmem:[%s3 + $0x2c] sm:$0xf]
  %v38 = vld [vmem:[%s3 + $0x30] sm:$0xf]
  %v39 = vld [vmem:[%s3 + $0x34] sm:$0xf]
  %v40 = vld [vmem:[%s3 + $0x38] sm:$0xf]
  %v41 = vld [vmem:[%s3 + $0x3c] sm:$0xf]
  %v42 = vld [vmem:[%s3 + $0x40] sm:$0xf]
  %v43 = vld [vmem:[%s3 + $0x44] sm:$0xf]
  %v44 = vld [vmem:[%s3 + $0x48] sm:$0xf]
  %v45 = vld [vmem:[%s3 + $0x4c] sm:$0xf]
  %v46 = vld [vmem:[%s3 + $0x50] sm:$0xf]
  %v47 = vld [vmem:[%s3 + $0x54] sm:$0xf]
  %v48 = vld [vmem:[%s3 + $0x58] sm:$0xf]
  %v49 = vld [vmem:[%s3 + $0x5c] sm:$0xf]
  %v50 = vld [vmem:[%s3 + $0x60] sm:$0xf]
  %v51 = vld [vmem:[%s3 + $0x64] sm:$0xf]
  %v52 = vld [vmem:[%s3 + $0x68] sm:$0xf]
  %v53 = vld [vmem:[%s3 + $0x6c] sm:$0xf]
  %v54 = vld [vmem:[%s3 + $0x70] sm:$0xf]
  %v55 = vld [vmem:[%s3 + $0x74] sm:$0xf]
  %v56 = vld [vmem:[%s3 + $0x78] sm:$0xf]
  %v57 = vld [vmem:[%s3 + $0x7c] sm:$0xf]
  %v58 = vld [vmem:[%s3 + $0x80] sm:$0xf]
  %v59 = vld [vmem:[%s3 + $0x84] sm:$0xf]
  %v60 = vld [vmem:[%s3 + $0x88] sm:$0xf]
  %v61 = vld [vmem:[%s3 + $0x8c] sm:$0xf]
  %v62 = vld [vmem:[%s3 + $0x90] sm:$0xf]
  %v63 = vld [vmem:[%s3 + $0x94] sm:$0xf]
  %v64 = vld [vmem:[%s3 + $0x98] sm:$0xf]
  %v65 = vld [vmem:[%s3 + $0x9c] sm:$0xf]
  %v66 = vld [vmem:[%s3 + $0xa0] sm:$0xf]
  %v67 = vld [vmem:[%s3 + $0xa4] sm:$0xf]
  %v68 = vld [vmem:[%s3 + $0xa8] sm:$0xf]
  %v69 = vld [vmem:[%s3 + $0xac] sm:$0xf]
  %v70 = vld [vmem:[%s3 + $0xb0] sm:$0xf]
  %v71 = vld [vmem:[%s3 + $0xb4] sm:$0xf]
  %v72 = vld [vmem:[%s3 + $0xb8] sm:$0xf]
  %v73 = vld [vmem:[%s3 + $0xbc] sm:$0xf]
  %v74 = vld [vmem:[%s3 + $0xc0] sm:$0xf]
  %v75 = vld [vmem:[%s3 + $0xc4] sm:$0xf]
  %v76 = vld [vmem:[%s3 + $0xc8] sm:$0xf]
  %v77 = vld [vmem:[%s3 + $0xcc] sm:$0xf]
  %v78 = vld [vmem:[%s3 + $0xd0] sm:$0xf]
  %v79 = vld [vmem:[%s3 + $0xd4] sm:$0xf]
  %v80 = vld [vmem:[%s3 + $0xd8] sm:$0xf]
  %v81 = vld [vmem:[%s3 + $0xdc] sm:$0xf]
  %v82 = vld [vmem:[%s3 + $0xe0] sm:$0xf]
  %v83 = vld [vmem:[%s3 + $0xe4] sm:$0xf]
  %v84 = vld [vmem:[%s3 + $0xe8] sm:$0xf]
  %v85 = vld [vmem:[%s3 + $0xec] sm:$0xf]
  %v86 = vld [vmem:[%s3 + $0xf0] sm:$0xf]
  %v87 = vld [vmem:[%s3 + $0xf4] sm:$0xf]
  %v88 = vld [vmem:[%s3 + $0xf8] sm:$0xf]
  %v89 = vld [vmem:[%s3 + $0xfc] sm:$0xf]
  %v90 = vld [vmem:[%s3 + $0x100] sm:$0xf]
  %v91 = vld [vmem:[%s3 + $0x104] sm:$0xf]
  %v92 = vld [vmem:[%s3 + $0x108] sm:$0xf]
  %v93 = vld [vmem:[%s3 + $0x10c] sm:$0xf]
  %v94 = vld [vmem:[%s3 + $0x110] sm:$0xf]
  %v95 = vld [vmem:[%s3 + $0x114] sm:$0xf]
  %v96 = vld [vmem:[%s3 + $0x118] sm:$0xf]
  %v97 = vld [vmem:[%s3 + $0x11c] sm:$0xf]
  %v98 = vld [vmem:[%s3 + $0x120] sm:$0xf]
  %v99 = vld [vmem:[%s3 + $0x124] sm:$0xf]
  %v100 = vld [vmem:[%s3 + $0x128] sm:$0xf]
  %v101 = vld [vmem:[%s3 + $0x12c] sm:$0xf]
  %v102 = vld [vmem:[%s3 + $0x130] sm:$0xf]
  %v103 = vld [vmem:[%s3 + $0x134] sm:$0xf]
  %v104 = vld [vmem:[%s3 + $0x138] sm:$0xf]
  %v105 = vld [vmem:[%s3 + $0x13c] sm:$0xf]
  %v106 = vld [vmem:[%s3 + $0x140] sm:$0xf]
  %v107 = vld [vmem:[%s3 + $0x144] sm:$0xf]
  %v108 = vld [vmem:[%s3 + $0x148] sm:$0xf]
  %v109 = vld [vmem:[%s3 + $0x14c] sm:$0xf]
  %v110 = vld [vmem:[%s3 + $0x150] sm:$0xf]
  %v111 = vld [vmem:[%s3 + $0x154] sm:$0xf]
  %v112 = vld [vmem:[%s3 + $0x158] sm:$0xf]
  %v113 = vld [vmem:[%s3 + $0x15c] sm:$0xf]
  %v114 = vld [vmem:[%s3 + $0x160] sm:$0xf]
  %v115 = vld [vmem:[%s3 + $0x164] sm:$0xf]
  %v116 = vld [vmem:[%s3 + $0x168] sm:$0xf]
  %v117 = vld [vmem:[%s3 + $0x16c] sm:$0xf]
  %v118 = vld [vmem:[%s3 + $0x170] sm:$0xf]
  %v119 = vld [vmem:[%s3 + $0x174] sm:$0xf]
  %v120 = vld [vmem:[%s3 + $0x178] sm:$0xf]
  %v121 = vld [vmem:[%s3 + $0x17c] sm:$0xf]
  %v122 = vld [vmem:[%s3 + $0x180] sm:$0xf]
  %v123 = vld [vmem:[%s3 + $0x184] sm:$0xf]
  %v124 = vld [vmem:[%s3 + $0x188] sm:$0xf]
  %v125 = vld [vmem:[%s3 + $0x18c] sm:$0xf]
  %v126 = vld [vmem:[%s3 + $0x190] sm:$0xf]
  %v127 = vld [vmem:[%s3 + $0x194] sm:$0xf]
  %v128 = vld [vmem:[%s3 + $0x198] sm:$0xf]
  %v129 = vld [vmem:[%s3 + $0x19c] sm:$0xf]
  %v130 = vld [vmem:[%s3 + $0x1a0] sm:$0xf]
  %v131 = vld [vmem:[%s3 + $0x1a4] sm:$0xf]
  %v132 = vld [vmem:[%s3 + $0x1a8] sm:$0xf]
  %v133 = vld [vmem:[%s3 + $0x1ac] sm:$0xf]
  %v134 = vld [vmem:[%s3 + $0x1b0] sm:$0xf]
  %v135 = vld [vmem:[%s3 + $0x1b4] sm:$0xf]
  %v136 = vld [vmem:[%s3 + $0x1b8] sm:$0xf]
  %v137 = vld [vmem:[%s3 + $0x1bc] sm:$0xf]
  %v138 = vld [vmem:[%s3 + $0x1c0] sm:$0xf]
  %v139 = vld [vmem:[%s3 + $0x1c4] sm:$0xf]
  %v140 = vld [vmem:[%s3 + $0x1c8] sm:$0xf]
  %v141 = vld [vmem:[%s3 + $0x1cc] sm:$0xf]
  %v142 = vld [vmem:[%s3 + $0x1d0] sm:$0xf]
  %v143 = vld [vmem:[%s3 + $0x1d4] sm:$0xf]
  %v144 = vld [vmem:[%s3 + $0x1d8] sm:$0xf]
  %v145 = vld [vmem:[%s3 + $0x1dc] sm:$0xf]
  %v146 = vld [vmem:[%s3 + $0x1e0] sm:$0xf]
  %v147 = vld [vmem:[%s3 + $0x1e4] sm:$0xf]
  %v148 = vld [vmem:[%s3 + $0x1e8] sm:$0xf]
  %v149 = vld [vmem:[%s3 + $0x1ec] sm:$0xf]
  %v150 = vld [vmem:[%s3 + $0x1f0] sm:$0xf]
  %v151 = vld [vmem:[%s3 + $0x1f4] sm:$0xf]
  %v152 = vld [vmem:[%s3 + $0x1f8] sm:$0xf]
  %v153 = vld [vmem:[%s3 + $0x1fc] sm:$0xf]
  %v154 = vld [vmem:[%s4] sm:$0x1]
  %v155 = vld [vmem:[%s5] sm:$0xf]
  %v156 = vld [vmem:[%s5 + $0x4] sm:$0xf]
  %v157 = vld [vmem:[%s5 + $0x8] sm:$0xf]
  %v158 = vld [vmem:[%s5 + $0xc] sm:$0xf]
  %v159 = vld [vmem:[%s5 + $0x10] sm:$0xf]
  %v160 = vld [vmem:[%s5 + $0x14] sm:$0xf]
  %v161 = vld [vmem:[%s5 + $0x18] sm:$0xf]
  %v162 = vld [vmem:[%s5 + $0x1c] sm:$0xf]
  %v163 = vld [vmem:[%s5 + $0x20] sm:$0xf]
  %v164 = vld [vmem:[%s5 + $0x24] sm:$0xf]
  %v165 = vld [vmem:[%s5 + $0x28] sm:$0xf]
  %v166 = vld [vmem:[%s5 + $0x2c] sm:$0xf]
  %v167 = vld [vmem:[%s5 + $0x30] sm:$0xf]
  %v168 = vld [vmem:[%s5 + $0x34] sm:$0xf]
  %v169 = vld [vmem:[%s5 + $0x38] sm:$0xf]
  %v170 = vld [vmem:[%s5 + $0x3c] sm:$0xf]
  %v171 = vld [vmem:[%s6] sm:$0x1]
  %v172 = vld [vmem:[%s0] sm:$0xff]
  %v173 = vld [vmem:[%s0 + $0x8] sm:$0xff]
  %176 = vst [vmem:[#allocation1] ss:$4 sm:$0xff] %v172
  %s177 = scalar_lea.vmem [#allocation1], 32
  %178 = vst [vmem:[%s177] ss:$4 sm:$0xff] %v173
  %v179 = vld.sshfl [vmem:[#allocation1] sm:$0xff pattern:$0x73625140]
  %v180 = vld.sshfl [vmem:[#allocation1 + $0x8] sm:$0xff pattern:$0x73625140]
  %v181 = vld.sshfl [vmem:[#allocation1 + $0x10] sm:$0xff pattern:$0x73625140]
  %v182 = vld.sshfl [vmem:[#allocation1 + $0x18] sm:$0xff pattern:$0x73625140]
  %v183 = vld.sshfl [vmem:[#allocation1 + $0x20] sm:$0xff pattern:$0x73625140]
  %v184 = vld.sshfl [vmem:[#allocation1 + $0x28] sm:$0xff pattern:$0x73625140]
  %v185 = vld.sshfl [vmem:[#allocation1 + $0x30] sm:$0xff pattern:$0x73625140]
  %v186 = vld.sshfl [vmem:[#allocation1 + $0x38] sm:$0xff pattern:$0x73625140]
  %v195 = vpack.c.bf16 %v179, %v179
  %v196 = vpack.c.bf16 %v180, %v180
  %v197 = vpack.c.bf16 %v181, %v181
  %v198 = vpack.c.bf16 %v182, %v182
  %v199 = vpack.c.bf16 %v183, %v183
  %v200 = vpack.c.bf16 %v184, %v184
  %v201 = vpack.c.bf16 %v185, %v185
  %v202 = vpack.c.bf16 %v186, %v186
  %v204 = vperm.slane %v154, 0
  %v334 = vunpack.c.l.b16 %v26
  %v335 = vunpack.c.l.b16 %v27
  %v336 = vunpack.c.l.b16 %v28
  %v337 = vunpack.c.l.b16 %v29
  %v338 = vunpack.c.l.b16 %v30
  %v339 = vunpack.c.l.b16 %v31
  %v340 = vunpack.c.l.b16 %v32
  %v341 = vunpack.c.l.b16 %v33
  %v342 = vunpack.c.l.b16 %v34
  %v343 = vunpack.c.l.b16 %v35
  %v344 = vunpack.c.l.b16 %v36
  %v345 = vunpack.c.l.b16 %v37
  %v346 = vunpack.c.l.b16 %v38
  %v347 = vunpack.c.l.b16 %v39
  %v348 = vunpack.c.l.b16 %v40
  %v349 = vunpack.c.l.b16 %v41
  %v350 = vunpack.c.l.b16 %v42
  %v351 = vunpack.c.l.b16 %v43
  %v352 = vunpack.c.l.b16 %v44
  %v353 = vunpack.c.l.b16 %v45
  %v354 = vunpack.c.l.b16 %v46
  %v355 = vunpack.c.l.b16 %v47
  %v356 = vunpack.c.l.b16 %v48
  %v357 = vunpack.c.l.b16 %v49
  %v358 = vunpack.c.l.b16 %v50
  %v359 = vunpack.c.l.b16 %v51
  %v360 = vunpack.c.l.b16 %v52
  %v361 = vunpack.c.l.b16 %v53
  %v362 = vunpack.c.l.b16 %v54
  %v363 = vunpack.c.l.b16 %v55
  %v364 = vunpack.c.l.b16 %v56
  %v365 = vunpack.c.l.b16 %v57
  %v366 = vunpack.c.l.b16 %v58
  %v367 = vunpack.c.l.b16 %v59
  %v368 = vunpack.c.l.b16 %v60
  %v369 = vunpack.c.l.b16 %v61
  %v370 = vunpack.c.l.b16 %v62
  %v371 = vunpack.c.l.b16 %v63
  %v372 = vunpack.c.l.b16 %v64
  %v373 = vunpack.c.l.b16 %v65
  %v374 = vunpack.c.l.b16 %v66
  %v375 = vunpack.c.l.b16 %v67
  %v376 = vunpack.c.l.b16 %v68
  %v377 = vunpack.c.l.b16 %v69
  %v378 = vunpack.c.l.b16 %v70
  %v379 = vunpack.c.l.b16 %v71
  %v380 = vunpack.c.l.b16 %v72
  %v381 = vunpack.c.l.b16 %v73
  %v382 = vunpack.c.l.b16 %v74
  %v383 = vunpack.c.l.b16 %v75
  %v384 = vunpack.c.l.b16 %v76
  %v385 = vunpack.c.l.b16 %v77
  %v386 = vunpack.c.l.b16 %v78
  %v387 = vunpack.c.l.b16 %v79
  %v388 = vunpack.c.l.b16 %v80
  %v389 = vunpack.c.l.b16 %v81
  %v390 = vunpack.c.l.b16 %v82
  %v391 = vunpack.c.l.b16 %v83
  %v392 = vunpack.c.l.b16 %v84
  %v393 = vunpack.c.l.b16 %v85
  %v394 = vunpack.c.l.b16 %v86
  %v395 = vunpack.c.l.b16 %v87
  %v396 = vunpack.c.l.b16 %v88
  %v397 = vunpack.c.l.b16 %v89
  %v398 = vunpack.c.l.b16 %v90
  %v399 = vunpack.c.l.b16 %v91
  %v400 = vunpack.c.l.b16 %v92
  %v401 = vunpack.c.l.b16 %v93
  %v402 = vunpack.c.l.b16 %v94
  %v403 = vunpack.c.l.b16 %v95
  %v404 = vunpack.c.l.b16 %v96
  %v405 = vunpack.c.l.b16 %v97
  %v406 = vunpack.c.l.b16 %v98
  %v407 = vunpack.c.l.b16 %v99
  %v408 = vunpack.c.l.b16 %v100
  %v409 = vunpack.c.l.b16 %v101
  %v410 = vunpack.c.l.b16 %v102
  %v411 = vunpack.c.l.b16 %v103
  %v412 = vunpack.c.l.b16 %v104
  %v413 = vunpack.c.l.b16 %v105
  %v414 = vunpack.c.l.b16 %v106
  %v415 = vunpack.c.l.b16 %v107
  %v416 = vunpack.c.l.b16 %v108
  %v417 = vunpack.c.l.b16 %v109
  %v418 = vunpack.c.l.b16 %v110
  %v419 = vunpack.c.l.b16 %v111
  %v420 = vunpack.c.l.b16 %v112
  %v421 = vunpack.c.l.b16 %v113
  %v422 = vunpack.c.l.b16 %v114
  %v423 = vunpack.c.l.b16 %v115
  %v424 = vunpack.c.l.b16 %v116
  %v425 = vunpack.c.l.b16 %v117
  %v426 = vunpack.c.l.b16 %v118
  %v427 = vunpack.c.l.b16 %v119
  %v428 = vunpack.c.l.b16 %v120
  %v429 = vunpack.c.l.b16 %v121
  %v430 = vunpack.c.l.b16 %v122
  %v431 = vunpack.c.l.b16 %v123
  %v432 = vunpack.c.l.b16 %v124
  %v433 = vunpack.c.l.b16 %v125
  %v434 = vunpack.c.l.b16 %v126
  %v435 = vunpack.c.l.b16 %v127
  %v436 = vunpack.c.l.b16 %v128
  %v437 = vunpack.c.l.b16 %v129
  %v438 = vunpack.c.l.b16 %v130
  %v439 = vunpack.c.l.b16 %v131
  %v440 = vunpack.c.l.b16 %v132
  %v441 = vunpack.c.l.b16 %v133
  %v442 = vunpack.c.l.b16 %v134
  %v443 = vunpack.c.l.b16 %v135
  %v444 = vunpack.c.l.b16 %v136
  %v445 = vunpack.c.l.b16 %v137
  %v446 = vunpack.c.l.b16 %v138
  %v447 = vunpack.c.l.b16 %v139
  %v448 = vunpack.c.l.b16 %v140
  %v449 = vunpack.c.l.b16 %v141
  %v450 = vunpack.c.l.b16 %v142
  %v451 = vunpack.c.l.b16 %v143
  %v452 = vunpack.c.l.b16 %v144
  %v453 = vunpack.c.l.b16 %v145
  %v454 = vunpack.c.l.b16 %v146
  %v455 = vunpack.c.l.b16 %v147
  %v456 = vunpack.c.l.b16 %v148
  %v457 = vunpack.c.l.b16 %v149
  %v458 = vunpack.c.l.b16 %v150
  %v459 = vunpack.c.l.b16 %v151
  %v460 = vunpack.c.l.b16 %v152
  %v461 = vunpack.c.l.b16 %v153
  %v462 = vpack.c.b16 %v335, %v334
  %v463 = vpack.c.b16 %v337, %v336
  %v464 = vpack.c.b16 %v339, %v338
  %v465 = vpack.c.b16 %v341, %v340
  %v466 = vpack.c.b16 %v343, %v342
  %v467 = vpack.c.b16 %v345, %v344
  %v468 = vpack.c.b16 %v347, %v346
  %v469 = vpack.c.b16 %v349, %v348
  %v470 = vpack.c.b16 %v351, %v350
  %v471 = vpack.c.b16 %v353, %v352
  %v472 = vpack.c.b16 %v355, %v354
  %v473 = vpack.c.b16 %v357, %v356
  %v474 = vpack.c.b16 %v359, %v358
  %v475 = vpack.c.b16 %v361, %v360
  %v476 = vpack.c.b16 %v363, %v362
  %v477 = vpack.c.b16 %v365, %v364
  %v478 = vpack.c.b16 %v367, %v366
  %v479 = vpack.c.b16 %v369, %v368
  %v480 = vpack.c.b16 %v371, %v370
  %v481 = vpack.c.b16 %v373, %v372
  %v482 = vpack.c.b16 %v375, %v374
  %v483 = vpack.c.b16 %v377, %v376
  %v484 = vpack.c.b16 %v379, %v378
  %v485 = vpack.c.b16 %v381, %v380
  %v486 = vpack.c.b16 %v383, %v382
  %v487 = vpack.c.b16 %v385, %v384
  %v488 = vpack.c.b16 %v387, %v386
  %v489 = vpack.c.b16 %v389, %v388
  %v490 = vpack.c.b16 %v391, %v390
  %v491 = vpack.c.b16 %v393, %v392
  %v492 = vpack.c.b16 %v395, %v394
  %v493 = vpack.c.b16 %v397, %v396
  %v494 = vpack.c.b16 %v399, %v398
  %v495 = vpack.c.b16 %v401, %v400
  %v496 = vpack.c.b16 %v403, %v402
  %v497 = vpack.c.b16 %v405, %v404
  %v498 = vpack.c.b16 %v407, %v406
  %v499 = vpack.c.b16 %v409, %v408
  %v500 = vpack.c.b16 %v411, %v410
  %v501 = vpack.c.b16 %v413, %v412
  %v502 = vpack.c.b16 %v415, %v414
  %v503 = vpack.c.b16 %v417, %v416
  %v504 = vpack.c.b16 %v419, %v418
  %v505 = vpack.c.b16 %v421, %v420
  %v506 = vpack.c.b16 %v423, %v422
  %v507 = vpack.c.b16 %v425, %v424
  %v508 = vpack.c.b16 %v427, %v426
  %v509 = vpack.c.b16 %v429, %v428
  %v510 = vpack.c.b16 %v431, %v430
  %v511 = vpack.c.b16 %v433, %v432
  %v512 = vpack.c.b16 %v435, %v434
  %v513 = vpack.c.b16 %v437, %v436
  %v514 = vpack.c.b16 %v439, %v438
  %v515 = vpack.c.b16 %v441, %v440
  %v516 = vpack.c.b16 %v443, %v442
  %v517 = vpack.c.b16 %v445, %v444
  %v518 = vpack.c.b16 %v447, %v446
  %v519 = vpack.c.b16 %v449, %v448
  %v520 = vpack.c.b16 %v451, %v450
  %v521 = vpack.c.b16 %v453, %v452
  %v522 = vpack.c.b16 %v455, %v454
  %v523 = vpack.c.b16 %v457, %v456
  %v524 = vpack.c.b16 %v459, %v458
  %v525 = vpack.c.b16 %v461, %v460
  %590 = vmatpush.bf16.msra.mxu0 %v469
  %591 = vmatpush.bf16.msra.mxu0 %v468
  %592 = vmatpush.bf16.msra.mxu0 %v467
  %593 = vmatpush.bf16.msra.mxu0 %v466
  %594 = vmatpush.bf16.msra.mxu0 %v465
  %595 = vmatpush.bf16.msra.mxu0 %v464
  %596 = vmatpush.bf16.msra.mxu0 %v463
  %597 = vmatpush.bf16.msra.mxu0 %v462
  %598 = vmatmul.bf16.gmra.mxu0 %v195
  %v599 = vpop.f32.mrf.mxu0
  %v600 = vadd.f32 %v204, %v599
  %v601 = vpop.f32.mrf.mxu0
  %602 = vdwg.mxu0
  %603 = vmatpush.bf16.msra.mxu0 %v477
  %604 = vmatpush.bf16.msra.mxu0 %v476
  %605 = vmatpush.bf16.msra.mxu0 %v475
  %606 = vmatpush.bf16.msra.mxu0 %v474
  %607 = vmatpush.bf16.msra.mxu0 %v473
  %608 = vmatpush.bf16.msra.mxu0 %v472
  %609 = vmatpush.bf16.msra.mxu0 %v471
  %610 = vmatpush.bf16.msra.mxu0 %v470
  %611 = vmatmul.bf16.gmra.mxu0 %v196
  %v612 = vpop.f32.mrf.mxu0
  %v613 = vadd.f32 %v600, %v612
  %v614 = vpop.f32.mrf.mxu0
  %615 = vdwg.mxu0
  %616 = vmatpush.bf16.msra.mxu0 %v485
  %617 = vmatpush.bf16.msra.mxu0 %v484
  %618 = vmatpush.bf16.msra.mxu0 %v483
  %619 = vmatpush.bf16.msra.mxu0 %v482
  %620 = vmatpush.bf16.msra.mxu0 %v481
  %621 = vmatpush.bf16.msra.mxu0 %v480
  %622 = vmatpush.bf16.msra.mxu0 %v479
  %623 = vmatpush.bf16.msra.mxu0 %v478
  %624 = vmatmul.bf16.gmra.mxu0 %v197
  %v625 = vpop.f32.mrf.mxu0
  %v626 = vadd.f32 %v613, %v625
  %v627 = vpop.f32.mrf.mxu0
  %628 = vdwg.mxu0
  %629 = vmatpush.bf16.msra.mxu0 %v493
  %630 = vmatpush.bf16.msra.mxu0 %v492
  %631 = vmatpush.bf16.msra.mxu0 %v491
  %632 = vmatpush.bf16.msra.mxu0 %v490
  %633 = vmatpush.bf16.msra.mxu0 %v489
  %634 = vmatpush.bf16.msra.mxu0 %v488
  %635 = vmatpush.bf16.msra.mxu0 %v487
  %636 = vmatpush.bf16.msra.mxu0 %v486
  %637 = vmatmul.bf16.gmra.mxu0 %v198
  %v638 = vpop.f32.mrf.mxu0
  %v639 = vadd.f32 %v626, %v638
  %v640 = vpop.f32.mrf.mxu0
  %641 = vdwg.mxu0
  %642 = vmatpush.bf16.msra.mxu0 %v501
  %643 = vmatpush.bf16.msra.mxu0 %v500
  %644 = vmatpush.bf16.msra.mxu0 %v499
  %645 = vmatpush.bf16.msra.mxu0 %v498
  %646 = vmatpush.bf16.msra.mxu0 %v497
  %647 = vmatpush.bf16.msra.mxu0 %v496
  %648 = vmatpush.bf16.msra.mxu0 %v495
  %649 = vmatpush.bf16.msra.mxu0 %v494
  %650 = vmatmul.bf16.gmra.mxu0 %v199
  %v651 = vpop.f32.mrf.mxu0
  %v652 = vadd.f32 %v639, %v651
  %v653 = vpop.f32.mrf.mxu0
  %654 = vdwg.mxu0
  %655 = vmatpush.bf16.msra.mxu0 %v509
  %656 = vmatpush.bf16.msra.mxu0 %v508
  %657 = vmatpush.bf16.msra.mxu0 %v507
  %658 = vmatpush.bf16.msra.mxu0 %v506
  %659 = vmatpush.bf16.msra.mxu0 %v505
  %660 = vmatpush.bf16.msra.mxu0 %v504
  %661 = vmatpush.bf16.msra.mxu0 %v503
  %662 = vmatpush.bf16.msra.mxu0 %v502
  %663 = vmatmul.bf16.gmra.mxu0 %v200
  %v664 = vpop.f32.mrf.mxu0
  %v665 = vadd.f32 %v652, %v664
  %v666 = vpop.f32.mrf.mxu0
  %667 = vdwg.mxu0
  %668 = vmatpush.bf16.msra.mxu0 %v517
  %669 = vmatpush.bf16.msra.mxu0 %v516
  %670 = vmatpush.bf16.msra.mxu0 %v515
  %671 = vmatpush.bf16.msra.mxu0 %v514
  %672 = vmatpush.bf16.msra.mxu0 %v513
  %673 = vmatpush.bf16.msra.mxu0 %v512
  %674 = vmatpush.bf16.msra.mxu0 %v511
  %675 = vmatpush.bf16.msra.mxu0 %v510
  %676 = vmatmul.bf16.gmra.mxu0 %v201
  %v677 = vpop.f32.mrf.mxu0
  %v678 = vadd.f32 %v665, %v677
  %v679 = vpop.f32.mrf.mxu0
  %680 = vdwg.mxu0
  %681 = vmatpush.bf16.msra.mxu0 %v525
  %682 = vmatpush.bf16.msra.mxu0 %v524
  %683 = vmatpush.bf16.msra.mxu0 %v523
  %684 = vmatpush.bf16.msra.mxu0 %v522
  %685 = vmatpush.bf16.msra.mxu0 %v521
  %686 = vmatpush.bf16.msra.mxu0 %v520
  %687 = vmatpush.bf16.msra.mxu0 %v519
  %688 = vmatpush.bf16.msra.mxu0 %v518
  %689 = vmatmul.bf16.gmra.mxu0 %v202
  %v690 = vpop.f32.mrf.mxu0
  %v691 = vadd.f32 %v678, %v690
  %v692 = vpop.f32.mrf.mxu0
  %693 = vdwg.mxu0
  %v694 = vmax.f32 %v691, 0.0
  %v695 = vpack.c.bf16 %v694, %v694
  %v697 = vperm.slane %v171, 0
  %v715 = vunpack.c.l.b16 %v155
  %v716 = vunpack.c.l.b16 %v156
  %v717 = vunpack.c.l.b16 %v157
  %v718 = vunpack.c.l.b16 %v158
  %v719 = vunpack.c.l.b16 %v159
  %v720 = vunpack.c.l.b16 %v160
  %v721 = vunpack.c.l.b16 %v161
  %v722 = vunpack.c.l.b16 %v162
  %v723 = vunpack.c.l.b16 %v163
  %v724 = vunpack.c.l.b16 %v164
  %v725 = vunpack.c.l.b16 %v165
  %v726 = vunpack.c.l.b16 %v166
  %v727 = vunpack.c.l.b16 %v167
  %v728 = vunpack.c.l.b16 %v168
  %v729 = vunpack.c.l.b16 %v169
  %v730 = vunpack.c.l.b16 %v170
  %v731 = vpack.c.b16 %v716, %v715
  %v732 = vpack.c.b16 %v718, %v717
  %v733 = vpack.c.b16 %v720, %v719
  %v734 = vpack.c.b16 %v722, %v721
  %v735 = vpack.c.b16 %v724, %v723
  %v736 = vpack.c.b16 %v726, %v725
  %v737 = vpack.c.b16 %v728, %v727
  %v738 = vpack.c.b16 %v730, %v729
  %747 = vmatpush.bf16.msra.mxu0 %v738
  %748 = vmatpush.bf16.msra.mxu0 %v737
  %749 = vmatpush.bf16.msra.mxu0 %v736
  %750 = vmatpush.bf16.msra.mxu0 %v735
  %751 = vmatpush.bf16.msra.mxu0 %v734
  %752 = vmatpush.bf16.msra.mxu0 %v733
  %753 = vmatpush.bf16.msra.mxu0 %v732
  %754 = vmatpush.bf16.msra.mxu0 %v731
  %755 = vmatmul.bf16.gmra.mxu0 %v695
  %v756 = vpop.f32.mrf.mxu0
  %v757 = vadd.f32 %v697, %v756
  %v758 = vpop.f32.mrf.mxu0
  %759 = vdwg.mxu0
  %760 = vst [vmem:[%s7] sm:$0x3] %v757
  %v761 = vld [vmem:[%s1] sm:$0xff]
  %v762 = vld [vmem:[%s1 + $0x8] sm:$0xff]
  %765 = vst [vmem:[#allocation1] ss:$4 sm:$0xff] %v761
  %s766 = scalar_lea.vmem [#allocation1], 32
  %767 = vst [vmem:[%s766] ss:$4 sm:$0xff] %v762
  %v768 = vld.sshfl [vmem:[#allocation1] sm:$0xff pattern:$0x73625140]
  %v769 = vld.sshfl [vmem:[#allocation1 + $0x8] sm:$0xff pattern:$0x73625140]
  %v770 = vld.sshfl [vmem:[#allocation1 + $0x10] sm:$0xff pattern:$0x73625140]
  %v771 = vld.sshfl [vmem:[#allocation1 + $0x18] sm:$0xff pattern:$0x73625140]
  %v772 = vld.sshfl [vmem:[#allocation1 + $0x20] sm:$0xff pattern:$0x73625140]
  %v773 = vld.sshfl [vmem:[#allocation1 + $0x28] sm:$0xff pattern:$0x73625140]
  %v774 = vld.sshfl [vmem:[#allocation1 + $0x30] sm:$0xff pattern:$0x73625140]
  %v775 = vld.sshfl [vmem:[#allocation1 + $0x38] sm:$0xff pattern:$0x73625140]
  %v784 = vpack.c.bf16 %v768, %v768
  %v785 = vpack.c.bf16 %v769, %v769
  %v786 = vpack.c.bf16 %v770, %v770
  %v787 = vpack.c.bf16 %v771, %v771
  %v788 = vpack.c.bf16 %v772, %v772
  %v789 = vpack.c.bf16 %v773, %v773
  %v790 = vpack.c.bf16 %v774, %v774
  %v791 = vpack.c.bf16 %v775, %v775
  %792 = vmatpush.bf16.msra.mxu0 %v469
  %793 = vmatpush.bf16.msra.mxu0 %v468
  %794 = vmatpush.bf16.msra.mxu0 %v467
  %795 = vmatpush.bf16.msra.mxu0 %v466
  %796 = vmatpush.bf16.msra.mxu0 %v465
  %797 = vmatpush.bf16.msra.mxu0 %v464
  %798 = vmatpush.bf16.msra.mxu0 %v463
  %799 = vmatpush.bf16.msra.mxu0 %v462
  %800 = vmatmul.bf16.gmra.mxu0 %v784
  %v801 = vpop.f32.mrf.mxu0
  %v802 = vadd.f32 %v204, %v801
  %v803 = vpop.f32.mrf.mxu0
  %804 = vdwg.mxu0
  %805 = vmatpush.bf16.msra.mxu0 %v477
  %806 = vmatpush.bf16.msra.mxu0 %v476
  %807 = vmatpush.bf16.msra.mxu0 %v475
  %808 = vmatpush.bf16.msra.mxu0 %v474
  %809 = vmatpush.bf16.msra.mxu0 %v473
  %810 = vmatpush.bf16.msra.mxu0 %v472
  %811 = vmatpush.bf16.msra.mxu0 %v471
  %812 = vmatpush.bf16.msra.mxu0 %v470
  %813 = vmatmul.bf16.gmra.mxu0 %v785
  %v814 = vpop.f32.mrf.mxu0
  %v815 = vadd.f32 %v802, %v814
  %v816 = vpop.f32.mrf.mxu0
  %817 = vdwg.mxu0
  %818 = vmatpush.bf16.msra.mxu0 %v485
  %819 = vmatpush.bf16.msra.mxu0 %v484
  %820 = vmatpush.bf16.msra.mxu0 %v483
  %821 = vmatpush.bf16.msra.mxu0 %v482
  %822 = vmatpush.bf16.msra.mxu0 %v481
  %823 = vmatpush.bf16.msra.mxu0 %v480
  %824 = vmatpush.bf16.msra.mxu0 %v479
  %825 = vmatpush.bf16.msra.mxu0 %v478
  %826 = vmatmul.bf16.gmra.mxu0 %v786
  %v827 = vpop.f32.mrf.mxu0
  %v828 = vadd.f32 %v815, %v827
  %v829 = vpop.f32.mrf.mxu0
  %830 = vdwg.mxu0
  %831 = vmatpush.bf16.msra.mxu0 %v493
  %832 = vmatpush.bf16.msra.mxu0 %v492
  %833 = vmatpush.bf16.msra.mxu0 %v491
  %834 = vmatpush.bf16.msra.mxu0 %v490
  %835 = vmatpush.bf16.msra.mxu0 %v489
  %836 = vmatpush.bf16.msra.mxu0 %v488
  %837 = vmatpush.bf16.msra.mxu0 %v487
  %838 = vmatpush.bf16.msra.mxu0 %v486
  %839 = vmatmul.bf16.gmra.mxu0 %v787
  %v840 = vpop.f32.mrf.mxu0
  %v841 = vadd.f32 %v828, %v840
  %v842 = vpop.f32.mrf.mxu0
  %843 = vdwg.mxu0
  %844 = vmatpush.bf16.msra.mxu0 %v501
  %845 = vmatpush.bf16.msra.mxu0 %v500
  %846 = vmatpush.bf16.msra.mxu0 %v499
  %847 = vmatpush.bf16.msra.mxu0 %v498
  %848 = vmatpush.bf16.msra.mxu0 %v497
  %849 = vmatpush.bf16.msra.mxu0 %v496
  %850 = vmatpush.bf16.msra.mxu0 %v495
  %851 = vmatpush.bf16.msra.mxu0 %v494
  %852 = vmatmul.bf16.gmra.mxu0 %v788
  %v853 = vpop.f32.mrf.mxu0
  %v854 = vadd.f32 %v841, %v853
  %v855 = vpop.f32.mrf.mxu0
  %856 = vdwg.mxu0
  %857 = vmatpush.bf16.msra.mxu0 %v509
  %858 = vmatpush.bf16.msra.mxu0 %v508
  %859 = vmatpush.bf16.msra.mxu0 %v507
  %860 = vmatpush.bf16.msra.mxu0 %v506
  %861 = vmatpush.bf16.msra.mxu0 %v505
  %862 = vmatpush.bf16.msra.mxu0 %v504
  %863 = vmatpush.bf16.msra.mxu0 %v503
  %864 = vmatpush.bf16.msra.mxu0 %v502
  %865 = vmatmul.bf16.gmra.mxu0 %v789
  %v866 = vpop.f32.mrf.mxu0
  %v867 = vadd.f32 %v854, %v866
  %v868 = vpop.f32.mrf.mxu0
  %869 = vdwg.mxu0
  %870 = vmatpush.bf16.msra.mxu0 %v517
  %871 = vmatpush.bf16.msra.mxu0 %v516
  %872 = vmatpush.bf16.msra.mxu0 %v515
  %873 = vmatpush.bf16.msra.mxu0 %v514
  %874 = vmatpush.bf16.msra.mxu0 %v513
  %875 = vmatpush.bf16.msra.mxu0 %v512
  %876 = vmatpush.bf16.msra.mxu0 %v511
  %877 = vmatpush.bf16.msra.mxu0 %v510
  %878 = vmatmul.bf16.gmra.mxu0 %v790
  %v879 = vpop.f32.mrf.mxu0
  %v880 = vadd.f32 %v867, %v879
  %v881 = vpop.f32.mrf.mxu0
  %882 = vdwg.mxu0
  %883 = vmatpush.bf16.msra.mxu0 %v525
  %884 = vmatpush.bf16.msra.mxu0 %v524
  %885 = vmatpush.bf16.msra.mxu0 %v523
  %886 = vmatpush.bf16.msra.mxu0 %v522
  %887 = vmatpush.bf16.msra.mxu0 %v521
  %888 = vmatpush.bf16.msra.mxu0 %v520
  %889 = vmatpush.bf16.msra.mxu0 %v519
  %890 = vmatpush.bf16.msra.mxu0 %v518
  %891 = vmatmul.bf16.gmra.mxu0 %v791
  %v892 = vpop.f32.mrf.mxu0
  %v893 = vadd.f32 %v880, %v892
  %v894 = vpop.f32.mrf.mxu0
  %895 = vdwg.mxu0
  %v896 = vmax.f32 %v893, 0.0
  %v897 = vpack.c.bf16 %v896, %v896
  %898 = vmatpush.bf16.msra.mxu0 %v738
  %899 = vmatpush.bf16.msra.mxu0 %v737
  %900 = vmatpush.bf16.msra.mxu0 %v736
  %901 = vmatpush.bf16.msra.mxu0 %v735
  %902 = vmatpush.bf16.msra.mxu0 %v734
  %903 = vmatpush.bf16.msra.mxu0 %v733
  %904 = vmatpush.bf16.msra.mxu0 %v732
  %905 = vmatpush.bf16.msra.mxu0 %v731
  %906 = vmatmul.bf16.gmra.mxu0 %v897
  %v907 = vpop.f32.mrf.mxu0
  %v908 = vadd.f32 %v697, %v907
  %v909 = vpop.f32.mrf.mxu0
  %910 = vdwg.mxu0
  %911 = vst [vmem:[%s7 + $0x2] sm:$0x3] %v908
  %v912 = vld [vmem:[%s2] sm:$0xff]
  %v913 = vld [vmem:[%s2 + $0x8] sm:$0xff]
  %916 = vst [vmem:[#allocation1] ss:$4 sm:$0xff] %v912
  %s917 = scalar_lea.vmem [#allocation1], 32
  %918 = vst [vmem:[%s917] ss:$4 sm:$0xff] %v913
  %v919 = vld.sshfl [vmem:[#allocation1] sm:$0xff pattern:$0x73625140]
  %v920 = vld.sshfl [vmem:[#allocation1 + $0x8] sm:$0xff pattern:$0x73625140]
  %v921 = vld.sshfl [vmem:[#allocation1 + $0x10] sm:$0xff pattern:$0x73625140]
  %v922 = vld.sshfl [vmem:[#allocation1 + $0x18] sm:$0xff pattern:$0x73625140]
  %v923 = vld.sshfl [vmem:[#allocation1 + $0x20] sm:$0xff pattern:$0x73625140]
  %v924 = vld.sshfl [vmem:[#allocation1 + $0x28] sm:$0xff pattern:$0x73625140]
  %v925 = vld.sshfl [vmem:[#allocation1 + $0x30] sm:$0xff pattern:$0x73625140]
  %v926 = vld.sshfl [vmem:[#allocation1 + $0x38] sm:$0xff pattern:$0x73625140]
  %v935 = vpack.c.bf16 %v919, %v919
  %v936 = vpack.c.bf16 %v920, %v920
  %v937 = vpack.c.bf16 %v921, %v921
  %v938 = vpack.c.bf16 %v922, %v922
  %v939 = vpack.c.bf16 %v923, %v923
  %v940 = vpack.c.bf16 %v924, %v924
  %v941 = vpack.c.bf16 %v925, %v925
  %v942 = vpack.c.bf16 %v926, %v926
  %943 = vmatpush.bf16.msra.mxu0 %v469
  %944 = vmatpush.bf16.msra.mxu0 %v468
  %945 = vmatpush.bf16.msra.mxu0 %v467
  %946 = vmatpush.bf16.msra.mxu0 %v466
  %947 = vmatpush.bf16.msra.mxu0 %v465
  %948 = vmatpush.bf16.msra.mxu0 %v464
  %949 = vmatpush.bf16.msra.mxu0 %v463
  %950 = vmatpush.bf16.msra.mxu0 %v462
  %951 = vmatmul.bf16.gmra.mxu0 %v935
  %v952 = vpop.f32.mrf.mxu0
  %v953 = vadd.f32 %v204, %v952
  %v954 = vpop.f32.mrf.mxu0
  %955 = vdwg.mxu0
  %956 = vmatpush.bf16.msra.mxu0 %v477
  %957 = vmatpush.bf16.msra.mxu0 %v476
  %958 = vmatpush.bf16.msra.mxu0 %v475
  %959 = vmatpush.bf16.msra.mxu0 %v474
  %960 = vmatpush.bf16.msra.mxu0 %v473
  %961 = vmatpush.bf16.msra.mxu0 %v472
  %962 = vmatpush.bf16.msra.mxu0 %v471
  %963 = vmatpush.bf16.msra.mxu0 %v470
  %964 = vmatmul.bf16.gmra.mxu0 %v936
  %v965 = vpop.f32.mrf.mxu0
  %v966 = vadd.f32 %v953, %v965
  %v967 = vpop.f32.mrf.mxu0
  %968 = vdwg.mxu0
  %969 = vmatpush.bf16.msra.mxu0 %v485
  %970 = vmatpush.bf16.msra.mxu0 %v484
  %971 = vmatpush.bf16.msra.mxu0 %v483
  %972 = vmatpush.bf16.msra.mxu0 %v482
  %973 = vmatpush.bf16.msra.mxu0 %v481
  %974 = vmatpush.bf16.msra.mxu0 %v480
  %975 = vmatpush.bf16.msra.mxu0 %v479
  %976 = vmatpush.bf16.msra.mxu0 %v478
  %977 = vmatmul.bf16.gmra.mxu0 %v937
  %v978 = vpop.f32.mrf.mxu0
  %v979 = vadd.f32 %v966, %v978
  %v980 = vpop.f32.mrf.mxu0
  %981 = vdwg.mxu0
  %982 = vmatpush.bf16.msra.mxu0 %v493
  %983 = vmatpush.bf16.msra.mxu0 %v492
  %984 = vmatpush.bf16.msra.mxu0 %v491
  %985 = vmatpush.bf16.msra.mxu0 %v490
  %986 = vmatpush.bf16.msra.mxu0 %v489
  %987 = vmatpush.bf16.msra.mxu0 %v488
  %988 = vmatpush.bf16.msra.mxu0 %v487
  %989 = vmatpush.bf16.msra.mxu0 %v486
  %990 = vmatmul.bf16.gmra.mxu0 %v938
  %v991 = vpop.f32.mrf.mxu0
  %v992 = vadd.f32 %v979, %v991
  %v993 = vpop.f32.mrf.mxu0
  %994 = vdwg.mxu0
  %995 = vmatpush.bf16.msra.mxu0 %v501
  %996 = vmatpush.bf16.msra.mxu0 %v500
  %997 = vmatpush.bf16.msra.mxu0 %v499
  %998 = vmatpush.bf16.msra.mxu0 %v498
  %999 = vmatpush.bf16.msra.mxu0 %v497
  %1000 = vmatpush.bf16.msra.mxu0 %v496
  %1001 = vmatpush.bf16.msra.mxu0 %v495
  %1002 = vmatpush.bf16.msra.mxu0 %v494
  %1003 = vmatmul.bf16.gmra.mxu0 %v939
  %v1004 = vpop.f32.mrf.mxu0
  %v1005 = vadd.f32 %v992, %v1004
  %v1006 = vpop.f32.mrf.mxu0
  %1007 = vdwg.mxu0
  %1008 = vmatpush.bf16.msra.mxu0 %v509
  %1009 = vmatpush.bf16.msra.mxu0 %v508
  %1010 = vmatpush.bf16.msra.mxu0 %v507
  %1011 = vmatpush.bf16.msra.mxu0 %v506
  %1012 = vmatpush.bf16.msra.mxu0 %v505
  %1013 = vmatpush.bf16.msra.mxu0 %v504
  %1014 = vmatpush.bf16.msra.mxu0 %v503
  %1015 = vmatpush.bf16.msra.mxu0 %v502
  %1016 = vmatmul.bf16.gmra.mxu0 %v940
  %v1017 = vpop.f32.mrf.mxu0
  %v1018 = vadd.f32 %v1005, %v1017
  %v1019 = vpop.f32.mrf.mxu0
  %1020 = vdwg.mxu0
  %1021 = vmatpush.bf16.msra.mxu0 %v517
  %1022 = vmatpush.bf16.msra.mxu0 %v516
  %1023 = vmatpush.bf16.msra.mxu0 %v515
  %1024 = vmatpush.bf16.msra.mxu0 %v514
  %1025 = vmatpush.bf16.msra.mxu0 %v513
  %1026 = vmatpush.bf16.msra.mxu0 %v512
  %1027 = vmatpush.bf16.msra.mxu0 %v511
  %1028 = vmatpush.bf16.msra.mxu0 %v510
  %1029 = vmatmul.bf16.gmra.mxu0 %v941
  %v1030 = vpop.f32.mrf.mxu0
  %v1031 = vadd.f32 %v1018, %v1030
  %v1032 = vpop.f32.mrf.mxu0
  %1033 = vdwg.mxu0
  %1034 = vmatpush.bf16.msra.mxu0 %v525
  %1035 = vmatpush.bf16.msra.mxu0 %v524
  %1036 = vmatpush.bf16.msra.mxu0 %v523
  %1037 = vmatpush.bf16.msra.mxu0 %v522
  %1038 = vmatpush.bf16.msra.mxu0 %v521
  %1039 = vmatpush.bf16.msra.mxu0 %v520
  %1040 = vmatpush.bf16.msra.mxu0 %v519
  %1041 = vmatpush.bf16.msra.mxu0 %v518
  %1042 = vmatmul.bf16.gmra.mxu0 %v942
  %v1043 = vpop.f32.mrf.mxu0
  %v1044 = vadd.f32 %v1031, %v1043
  %v1045 = vpop.f32.mrf.mxu0
  %1046 = vdwg.mxu0
  %v1047 = vmax.f32 %v1044, 0.0
  %v1048 = vpack.c.bf16 %v1047, %v1047
  %1049 = vmatpush.bf16.msra.mxu0 %v738
  %1050 = vmatpush.bf16.msra.mxu0 %v737
  %1051 = vmatpush.bf16.msra.mxu0 %v736
  %1052 = vmatpush.bf16.msra.mxu0 %v735
  %1053 = vmatpush.bf16.msra.mxu0 %v734
  %1054 = vmatpush.bf16.msra.mxu0 %v733
  %1055 = vmatpush.bf16.msra.mxu0 %v732
  %1056 = vmatpush.bf16.msra.mxu0 %v731
  %1057 = vmatmul.bf16.gmra.mxu0 %v1048
  %v1058 = vpop.f32.mrf.mxu0
  %v1059 = vadd.f32 %v697, %v1058
  %v1060 = vpop.f32.mrf.mxu0
  %1061 = vdwg.mxu0
  %1062 = vst [vmem:[%s7 + $0x4] sm:$0x3] %v1059
  // Predicated region
  $region30: #{_triplet_forward_impl.1} parent=0 // pred_check
    _
  $region31: #{_triplet_forward_impl.1} parent=0 // pred_check_branch
    %1064 = sbr.rel (0) target = $region33
  $region32: #{_triplet_forward_impl.1} parent=0 // pred_region
    _
  $region33: #{_triplet_forward_impl.1} parent=0 // pred_fallthru
    _
  // Predicated region
  $region34: #{_triplet_forward_impl.1} parent=0 // pred_check
    _
  $region35: #{_triplet_forward_impl.1} parent=0 // pred_check_branch
    %1066 = sbr.rel (0) target = $region37
  $region36: #{_triplet_forward_impl.1} parent=0 // pred_region
    _
  $region37: #{_triplet_forward_impl.1} parent=0 // pred_fallthru
    _

// kernel: _triplet_forward_impl.1
$region0: #{_triplet_forward_impl.1}
  #allocation0 [shape = 'u32[]', space=smem, size = 0x4, offset = 0x4, fixed_abs, tag = 'smem constant byte address 0x4 - core index']
  #allocation1 [shape = 'u32[72,128]{1,0:T(1,128)}', space=vmem, size = 0x9000, scoped, tag = 'internal scratch']
  %s0 = inlined_call_operand.vmem [shape: f32[2,1024], index: 0, kind: input, shape index: {}]
  %s1 = inlined_call_operand.vmem [shape: f32[2,1024], index: 1, kind: input, shape index: {}]
  %s2 = inlined_call_operand.vmem [shape: f32[2,1024], index: 2, kind: input, shape index: {}]
  %s3 = inlined_call_operand.vmem [shape: bf16[1024,128], index: 3, kind: input, shape index: {}]
  %s4 = inlined_call_operand.vmem [shape: f32[1,128], index: 4, kind: input, shape index: {}]
  %s5 = inlined_call_operand.vmem [shape: bf16[128,128], index: 5, kind: input, shape index: {}]
  %s6 = inlined_call_operand.vmem [shape: f32[1,128], index: 6, kind: input, shape index: {}]
  %s7 = inlined_call_operand.vmem [shape: f32[2,384], index: 7, kind: output, shape index: {}]
  %s8 = sld [smem:[#allocation0]]
  $region38: #{_triplet_forward_impl.1} parent=0
    _
  %s10 = ssub.s32 1, %s8
  %s11 = scalar_select 0, %s10, %s8
  // Predicated region
  $region2: #{_triplet_forward_impl.1} parent=0 // pred_check
    _
  $region3: #{_triplet_forward_impl.1} parent=0 // pred_check_branch
    %13 = sbr.rel (0) target = $region5
  $region4: #{_triplet_forward_impl.1} parent=0 // pred_region
    _
  $region5: #{_triplet_forward_impl.1} parent=0 // pred_fallthru
    _
  // Predicated region
  $region6: #{_triplet_forward_impl.1} parent=0 // pred_check
    _
  $region7: #{_triplet_forward_impl.1} parent=0 // pred_check_branch
    %15 = sbr.rel (0) target = $region9
  $region8: #{_triplet_forward_impl.1} parent=0 // pred_region
    _
  $region9: #{_triplet_forward_impl.1} parent=0 // pred_fallthru
    _
  // Predicated region
  $region10: #{_triplet_forward_impl.1} parent=0 // pred_check
    _
  $region11: #{_triplet_forward_impl.1} parent=0 // pred_check_branch
    %17 = sbr.rel (0) target = $region13
  $region12: #{_triplet_forward_impl.1} parent=0 // pred_region
    _
  $region13: #{_triplet_forward_impl.1} parent=0 // pred_fallthru
    _
  // Predicated region
  $region14: #{_triplet_forward_impl.1} parent=0 // pred_check
    _
  $region15: #{_triplet_forward_impl.1} parent=0 // pred_check_branch
    %19 = sbr.rel (0) target = $region17
  $region16: #{_triplet_forward_impl.1} parent=0 // pred_region
    _
  $region17: #{_triplet_forward_impl.1} parent=0 // pred_fallthru
    _
  // Predicated region
  $region18: #{_triplet_forward_impl.1} parent=0 // pred_check
    _
  $region19: #{_triplet_forward_impl.1} parent=0 // pred_check_branch
    %21 = sbr.rel (0) target = $region21
  $region20: #{_triplet_forward_impl.1} parent=0 // pred_region
    _
  $region21: #{_triplet_forward_impl.1} parent=0 // pred_fallthru
    _
  // Predicated region
  $region22: #{_triplet_forward_impl.1} parent=0 // pred_check
    _
  $region23: #{_triplet_forward_impl.1} parent=0 // pred_check_branch
    %23 = sbr.rel (0) target = $region25
  $region24: #{_triplet_forward_impl.1} parent=0 // pred_region
    _
  $region25: #{_triplet_forward_impl.1} parent=0 // pred_fallthru
    _
  // Predicated region
  $region26: #{_triplet_forward_impl.1} parent=0 // pred_check
    _
  $region27: #{_triplet_forward_impl.1} parent=0 // pred_check_branch
    %25 = sbr.rel (0) target = $region29
  $region28: #{_triplet_forward_impl.1} parent=0 // pred_region
    _
  $region29: #{_triplet_forward_impl.1} parent=0 // pred_fallthru
    _
  %v26 = vld [vmem:[%s3] sm:$0xf]
  %v27 = vld [vmem:[%s3 + $0x4] sm:$0xf]
  %v28 = vld [vmem:[%s3 + $0x8] sm:$0xf]
  %v29 = vld [vmem:[%s3 + $0xc] sm:$0xf]
  %v30 = vld [vmem:[%s3 + $0x10] sm:$0xf]
  %v31 = vld [vmem:[%s3 + $0x14] sm:$0xf]
  %v32 = vld [vmem:[%s3 + $0x18] sm:$0xf]
  %v33 = vld [vmem:[%s3 + $0x1c] sm:$0xf]
  %v34 = vld [vmem:[%s3 + $0x20] sm:$0xf]
  %v35 = vld [vmem:[%s3 + $0x24] sm:$0xf]
  %v36 = vld [vmem:[%s3 + $0x28] sm:$0xf]
  %v37 = vld [vmem:[%s3 + $0x2c] sm:$0xf]
  %v38 = vld [vmem:[%s3 + $0x30] sm:$0xf]
  %v39 = vld [vmem:[%s3 + $0x34] sm:$0xf]
  %v40 = vld [vmem:[%s3 + $0x38] sm:$0xf]
  %v41 = vld [vmem:[%s3 + $0x3c] sm:$0xf]
  %v42 = vld [vmem:[%s3 + $0x40] sm:$0xf]
  %v43 = vld [vmem:[%s3 + $0x44] sm:$0xf]
  %v44 = vld [vmem:[%s3 + $0x48] sm:$0xf]
  %v45 = vld [vmem:[%s3 + $0x4c] sm:$0xf]
  %v46 = vld [vmem:[%s3 + $0x50] sm:$0xf]
  %v47 = vld [vmem:[%s3 + $0x54] sm:$0xf]
  %v48 = vld [vmem:[%s3 + $0x58] sm:$0xf]
  %v49 = vld [vmem:[%s3 + $0x5c] sm:$0xf]
  %v50 = vld [vmem:[%s3 + $0x60] sm:$0xf]
  %v51 = vld [vmem:[%s3 + $0x64] sm:$0xf]
  %v52 = vld [vmem:[%s3 + $0x68] sm:$0xf]
  %v53 = vld [vmem:[%s3 + $0x6c] sm:$0xf]
  %v54 = vld [vmem:[%s3 + $0x70] sm:$0xf]
  %v55 = vld [vmem:[%s3 + $0x74] sm:$0xf]
  %v56 = vld [vmem:[%s3 + $0x78] sm:$0xf]
  %v57 = vld [vmem:[%s3 + $0x7c] sm:$0xf]
  %v58 = vld [vmem:[%s3 + $0x80] sm:$0xf]
  %v59 = vld [vmem:[%s3 + $0x84] sm:$0xf]
  %v60 = vld [vmem:[%s3 + $0x88] sm:$0xf]
  %v61 = vld [vmem:[%s3 + $0x8c] sm:$0xf]
  %v62 = vld [vmem:[%s3 + $0x90] sm:$0xf]
  %v63 = vld [vmem:[%s3 + $0x94] sm:$0xf]
  %v64 = vld [vmem:[%s3 + $0x98] sm:$0xf]
  %v65 = vld [vmem:[%s3 + $0x9c] sm:$0xf]
  %v66 = vld [vmem:[%s3 + $0xa0] sm:$0xf]
  %v67 = vld [vmem:[%s3 + $0xa4] sm:$0xf]
  %v68 = vld [vmem:[%s3 + $0xa8] sm:$0xf]
  %v69 = vld [vmem:[%s3 + $0xac] sm:$0xf]
  %v70 = vld [vmem:[%s3 + $0xb0] sm:$0xf]
  %v71 = vld [vmem:[%s3 + $0xb4] sm:$0xf]
  %v72 = vld [vmem:[%s3 + $0xb8] sm:$0xf]
  %v73 = vld [vmem:[%s3 + $0xbc] sm:$0xf]
  %v74 = vld [vmem:[%s3 + $0xc0] sm:$0xf]
  %v75 = vld [vmem:[%s3 + $0xc4] sm:$0xf]
  %v76 = vld [vmem:[%s3 + $0xc8] sm:$0xf]
  %v77 = vld [vmem:[%s3 + $0xcc] sm:$0xf]
  %v78 = vld [vmem:[%s3 + $0xd0] sm:$0xf]
  %v79 = vld [vmem:[%s3 + $0xd4] sm:$0xf]
  %v80 = vld [vmem:[%s3 + $0xd8] sm:$0xf]
  %v81 = vld [vmem:[%s3 + $0xdc] sm:$0xf]
  %v82 = vld [vmem:[%s3 + $0xe0] sm:$0xf]
  %v83 = vld [vmem:[%s3 + $0xe4] sm:$0xf]
  %v84 = vld [vmem:[%s3 + $0xe8] sm:$0xf]
  %v85 = vld [vmem:[%s3 + $0xec] sm:$0xf]
  %v86 = vld [vmem:[%s3 + $0xf0] sm:$0xf]
  %v87 = vld [vmem:[%s3 + $0xf4] sm:$0xf]
  %v88 = vld [vmem:[%s3 + $0xf8] sm:$0xf]
  %v89 = vld [vmem:[%s3 + $0xfc] sm:$0xf]
  %v90 = vld [vmem:[%s3 + $0x100] sm:$0xf]
  %v91 = vld [vmem:[%s3 + $0x104] sm:$0xf]
  %v92 = vld [vmem:[%s3 + $0x108] sm:$0xf]
  %v93 = vld [vmem:[%s3 + $0x10c] sm:$0xf]
  %v94 = vld [vmem:[%s3 + $0x110] sm:$0xf]
  %v95 = vld [vmem:[%s3 + $0x114] sm:$0xf]
  %v96 = vld [vmem:[%s3 + $0x118] sm:$0xf]
  %v97 = vld [vmem:[%s3 + $0x11c] sm:$0xf]
  %v98 = vld [vmem:[%s3 + $0x120] sm:$0xf]
  %v99 = vld [vmem:[%s3 + $0x124] sm:$0xf]
  %v100 = vld [vmem:[%s3 + $0x128] sm:$0xf]
  %v101 = vld [vmem:[%s3 + $0x12c] sm:$0xf]
  %v102 = vld [vmem:[%s3 + $0x130] sm:$0xf]
  %v103 = vld [vmem:[%s3 + $0x134] sm:$0xf]
  %v104 = vld [vmem:[%s3 + $0x138] sm:$0xf]
  %v105 = vld [vmem:[%s3 + $0x13c] sm:$0xf]
  %v106 = vld [vmem:[%s3 + $0x140] sm:$0xf]
  %v107 = vld [vmem:[%s3 + $0x144] sm:$0xf]
  %v108 = vld [vmem:[%s3 + $0x148] sm:$0xf]
  %v109 = vld [vmem:[%s3 + $0x14c] sm:$0xf]
  %v110 = vld [vmem:[%s3 + $0x150] sm:$0xf]
  %v111 = vld [vmem:[%s3 + $0x154] sm:$0xf]
  %v112 = vld [vmem:[%s3 + $0x158] sm:$0xf]
  %v113 = vld [vmem:[%s3 + $0x15c] sm:$0xf]
  %v114 = vld [vmem:[%s3 + $0x160] sm:$0xf]
  %v115 = vld [vmem:[%s3 + $0x164] sm:$0xf]
  %v116 = vld [vmem:[%s3 + $0x168] sm:$0xf]
  %v117 = vld [vmem:[%s3 + $0x16c] sm:$0xf]
  %v118 = vld [vmem:[%s3 + $0x170] sm:$0xf]
  %v119 = vld [vmem:[%s3 + $0x174] sm:$0xf]
  %v120 = vld [vmem:[%s3 + $0x178] sm:$0xf]
  %v121 = vld [vmem:[%s3 + $0x17c] sm:$0xf]
  %v122 = vld [vmem:[%s3 + $0x180] sm:$0xf]
  %v123 = vld [vmem:[%s3 + $0x184] sm:$0xf]
  %v124 = vld [vmem:[%s3 + $0x188] sm:$0xf]
  %v125 = vld [vmem:[%s3 + $0x18c] sm:$0xf]
  %v126 = vld [vmem:[%s3 + $0x190] sm:$0xf]
  %v127 = vld [vmem:[%s3 + $0x194] sm:$0xf]
  %v128 = vld [vmem:[%s3 + $0x198] sm:$0xf]
  %v129 = vld [vmem:[%s3 + $0x19c] sm:$0xf]
  %v130 = vld [vmem:[%s3 + $0x1a0] sm:$0xf]
  %v131 = vld [vmem:[%s3 + $0x1a4] sm:$0xf]
  %v132 = vld [vmem:[%s3 + $0x1a8] sm:$0xf]
  %v133 = vld [vmem:[%s3 + $0x1ac] sm:$0xf]
  %v134 = vld [vmem:[%s3 + $0x1b0] sm:$0xf]
  %v135 = vld [vmem:[%s3 + $0x1b4] sm:$0xf]
  %v136 = vld [vmem:[%s3 + $0x1b8] sm:$0xf]
  %v137 = vld [vmem:[%s3 + $0x1bc] sm:$0xf]
  %v138 = vld [vmem:[%s3 + $0x1c0] sm:$0xf]
  %v139 = vld [vmem:[%s3 + $0x1c4] sm:$0xf]
  %v140 = vld [vmem:[%s3 + $0x1c8] sm:$0xf]
  %v141 = vld [vmem:[%s3 + $0x1cc] sm:$0xf]
  %v142 = vld [vmem:[%s3 + $0x1d0] sm:$0xf]
  %v143 = vld [vmem:[%s3 + $0x1d4] sm:$0xf]
  %v144 = vld [vmem:[%s3 + $0x1d8] sm:$0xf]
  %v145 = vld [vmem:[%s3 + $0x1dc] sm:$0xf]
  %v146 = vld [vmem:[%s3 + $0x1e0] sm:$0xf]
  %v147 = vld [vmem:[%s3 + $0x1e4] sm:$0xf]
  %v148 = vld [vmem:[%s3 + $0x1e8] sm:$0xf]
  %v149 = vld [vmem:[%s3 + $0x1ec] sm:$0xf]
  %v150 = vld [vmem:[%s3 + $0x1f0] sm:$0xf]
  %v151 = vld [vmem:[%s3 + $0x1f4] sm:$0xf]
  %v152 = vld [vmem:[%s3 + $0x1f8] sm:$0xf]
  %v153 = vld [vmem:[%s3 + $0x1fc] sm:$0xf]
  %v154 = vld [vmem:[%s4] sm:$0x1]
  %v155 = vld [vmem:[%s5] sm:$0xf]
  %v156 = vld [vmem:[%s5 + $0x4] sm:$0xf]
  %v157 = vld [vmem:[%s5 + $0x8] sm:$0xf]
  %v158 = vld [vmem:[%s5 + $0xc] sm:$0xf]
  %v159 = vld [vmem:[%s5 + $0x10] sm:$0xf]
  %v160 = vld [vmem:[%s5 + $0x14] sm:$0xf]
  %v161 = vld [vmem:[%s5 + $0x18] sm:$0xf]
  %v162 = vld [vmem:[%s5 + $0x1c] sm:$0xf]
  %v163 = vld [vmem:[%s5 + $0x20] sm:$0xf]
  %v164 = vld [vmem:[%s5 + $0x24] sm:$0xf]
  %v165 = vld [vmem:[%s5 + $0x28] sm:$0xf]
  %v166 = vld [vmem:[%s5 + $0x2c] sm:$0xf]
  %v167 = vld [vmem:[%s5 + $0x30] sm:$0xf]
  %v168 = vld [vmem:[%s5 + $0x34] sm:$0xf]
  %v169 = vld [vmem:[%s5 + $0x38] sm:$0xf]
  %v170 = vld [vmem:[%s5 + $0x3c] sm:$0xf]
  %v171 = vld [vmem:[%s6] sm:$0x1]
  %v172 = vld [vmem:[%s0] sm:$0xff]
  %v173 = vld [vmem:[%s0 + $0x8] sm:$0xff]
  %176 = vst [vmem:[#allocation1] ss:$4 sm:$0xff] %v172
  %s177 = scalar_lea.vmem [#allocation1], 32
  %178 = vst [vmem:[%s177] ss:$4 sm:$0xff] %v173
  %v179 = vld.sshfl [vmem:[#allocation1] sm:$0xff pattern:$0x73625140]
  %v180 = vld.sshfl [vmem:[#allocation1 + $0x8] sm:$0xff pattern:$0x73625140]
  %v181 = vld.sshfl [vmem:[#allocation1 + $0x10] sm:$0xff pattern:$0x73625140]
  %v182 = vld.sshfl [vmem:[#allocation1 + $0x18] sm:$0xff pattern:$0x73625140]
  %v183 = vld.sshfl [vmem:[#allocation1 + $0x20] sm:$0xff pattern:$0x73625140]
  %v184 = vld.sshfl [vmem:[#allocation1 + $0x28] sm:$0xff pattern:$0x73625140]
  %v185 = vld.sshfl [vmem:[#allocation1 + $0x30] sm:$0xff pattern:$0x73625140]
  %v186 = vld.sshfl [vmem:[#allocation1 + $0x38] sm:$0xff pattern:$0x73625140]
  %v195 = vpack.c.bf16 %v179, %v179
  %v196 = vpack.c.bf16 %v180, %v180
  %v197 = vpack.c.bf16 %v181, %v181
  %v198 = vpack.c.bf16 %v182, %v182
  %v199 = vpack.c.bf16 %v183, %v183
  %v200 = vpack.c.bf16 %v184, %v184
  %v201 = vpack.c.bf16 %v185, %v185
  %v202 = vpack.c.bf16 %v186, %v186
  %v204 = vperm.slane %v154, 0
  %v334 = vunpack.c.l.b16 %v26
  %v335 = vunpack.c.l.b16 %v27
  %v336 = vunpack.c.l.b16 %v28
  %v337 = vunpack.c.l.b16 %v29
  %v338 = vunpack.c.l.b16 %v30
  %v339 = vunpack.c.l.b16 %v31
  %v340 = vunpack.c.l.b16 %v32
  %v341 = vunpack.c.l.b16 %v33
  %v342 = vunpack.c.l.b16 %v34
  %v343 = vunpack.c.l.b16 %v35
  %v344 = vunpack.c.l.b16 %v36
  %v345 = vunpack.c.l.b16 %v37
  %v346 = vunpack.c.l.b16 %v38
  %v347 = vunpack.c.l.b16 %v39
  %v348 = vunpack.c.l.b16 %v40
  %v349 = vunpack.c.l.b16 %v41
  %v350 = vunpack.c.l.b16 %v42
  %v351 = vunpack.c.l.b16 %v43
  %v352 = vunpack.c.l.b16 %v44
  %v353 = vunpack.c.l.b16 %v45
  %v354 = vunpack.c.l.b16 %v46
  %v355 = vunpack.c.l.b16 %v47
  %v356 = vunpack.c.l.b16 %v48
  %v357 = vunpack.c.l.b16 %v49
  %v358 = vunpack.c.l.b16 %v50
  %v359 = vunpack.c.l.b16 %v51
  %v360 = vunpack.c.l.b16 %v52
  %v361 = vunpack.c.l.b16 %v53
  %v362 = vunpack.c.l.b16 %v54
  %v363 = vunpack.c.l.b16 %v55
  %v364 = vunpack.c.l.b16 %v56
  %v365 = vunpack.c.l.b16 %v57
  %v366 = vunpack.c.l.b16 %v58
  %v367 = vunpack.c.l.b16 %v59
  %v368 = vunpack.c.l.b16 %v60
  %v369 = vunpack.c.l.b16 %v61
  %v370 = vunpack.c.l.b16 %v62
  %v371 = vunpack.c.l.b16 %v63
  %v372 = vunpack.c.l.b16 %v64
  %v373 = vunpack.c.l.b16 %v65
  %v374 = vunpack.c.l.b16 %v66
  %v375 = vunpack.c.l.b16 %v67
  %v376 = vunpack.c.l.b16 %v68
  %v377 = vunpack.c.l.b16 %v69
  %v378 = vunpack.c.l.b16 %v70
  %v379 = vunpack.c.l.b16 %v71
  %v380 = vunpack.c.l.b16 %v72
  %v381 = vunpack.c.l.b16 %v73
  %v382 = vunpack.c.l.b16 %v74
  %v383 = vunpack.c.l.b16 %v75
  %v384 = vunpack.c.l.b16 %v76
  %v385 = vunpack.c.l.b16 %v77
  %v386 = vunpack.c.l.b16 %v78
  %v387 = vunpack.c.l.b16 %v79
  %v388 = vunpack.c.l.b16 %v80
  %v389 = vunpack.c.l.b16 %v81
  %v390 = vunpack.c.l.b16 %v82
  %v391 = vunpack.c.l.b16 %v83
  %v392 = vunpack.c.l.b16 %v84
  %v393 = vunpack.c.l.b16 %v85
  %v394 = vunpack.c.l.b16 %v86
  %v395 = vunpack.c.l.b16 %v87
  %v396 = vunpack.c.l.b16 %v88
  %v397 = vunpack.c.l.b16 %v89
  %v398 = vunpack.c.l.b16 %v90
  %v399 = vunpack.c.l.b16 %v91
  %v400 = vunpack.c.l.b16 %v92
  %v401 = vunpack.c.l.b16 %v93
  %v402 = vunpack.c.l.b16 %v94
  %v403 = vunpack.c.l.b16 %v95
  %v404 = vunpack.c.l.b16 %v96
  %v405 = vunpack.c.l.b16 %v97
  %v406 = vunpack.c.l.b16 %v98
  %v407 = vunpack.c.l.b16 %v99
  %v408 = vunpack.c.l.b16 %v100
  %v409 = vunpack.c.l.b16 %v101
  %v410 = vunpack.c.l.b16 %v102
  %v411 = vunpack.c.l.b16 %v103
  %v412 = vunpack.c.l.b16 %v104
  %v413 = vunpack.c.l.b16 %v105
  %v414 = vunpack.c.l.b16 %v106
  %v415 = vunpack.c.l.b16 %v107
  %v416 = vunpack.c.l.b16 %v108
  %v417 = vunpack.c.l.b16 %v109
  %v418 = vunpack.c.l.b16 %v110
  %v419 = vunpack.c.l.b16 %v111
  %v420 = vunpack.c.l.b16 %v112
  %v421 = vunpack.c.l.b16 %v113
  %v422 = vunpack.c.l.b16 %v114
  %v423 = vunpack.c.l.b16 %v115
  %v424 = vunpack.c.l.b16 %v116
  %v425 = vunpack.c.l.b16 %v117
  %v426 = vunpack.c.l.b16 %v118
  %v427 = vunpack.c.l.b16 %v119
  %v428 = vunpack.c.l.b16 %v120
  %v429 = vunpack.c.l.b16 %v121
  %v430 = vunpack.c.l.b16 %v122
  %v431 = vunpack.c.l.b16 %v123
  %v432 = vunpack.c.l.b16 %v124
  %v433 = vunpack.c.l.b16 %v125
  %v434 = vunpack.c.l.b16 %v126
  %v435 = vunpack.c.l.b16 %v127
  %v436 = vunpack.c.l.b16 %v128
  %v437 = vunpack.c.l.b16 %v129
  %v438 = vunpack.c.l.b16 %v130
  %v439 = vunpack.c.l.b16 %v131
  %v440 = vunpack.c.l.b16 %v132
  %v441 = vunpack.c.l.b16 %v133
  %v442 = vunpack.c.l.b16 %v134
  %v443 = vunpack.c.l.b16 %v135
  %v444 = vunpack.c.l.b16 %v136
  %v445 = vunpack.c.l.b16 %v137
  %v446 = vunpack.c.l.b16 %v138
  %v447 = vunpack.c.l.b16 %v139
  %v448 = vunpack.c.l.b16 %v140
  %v449 = vunpack.c.l.b16 %v141
  %v450 = vunpack.c.l.b16 %v142
  %v451 = vunpack.c.l.b16 %v143
  %v452 = vunpack.c.l.b16 %v144
  %v453 = vunpack.c.l.b16 %v145
  %v454 = vunpack.c.l.b16 %v146
  %v455 = vunpack.c.l.b16 %v147
  %v456 = vunpack.c.l.b16 %v148
  %v457 = vunpack.c.l.b16 %v149
  %v458 = vunpack.c.l.b16 %v150
  %v459 = vunpack.c.l.b16 %v151
  %v460 = vunpack.c.l.b16 %v152
  %v461 = vunpack.c.l.b16 %v153
  %v462 = vpack.c.b16 %v335, %v334
  %v463 = vpack.c.b16 %v337, %v336
  %v464 = vpack.c.b16 %v339, %v338
  %v465 = vpack.c.b16 %v341, %v340
  %v466 = vpack.c.b16 %v343, %v342
  %v467 = vpack.c.b16 %v345, %v344
  %v468 = vpack.c.b16 %v347, %v346
  %v469 = vpack.c.b16 %v349, %v348
  %v470 = vpack.c.b16 %v351, %v350
  %v471 = vpack.c.b16 %v353, %v352
  %v472 = vpack.c.b16 %v355, %v354
  %v473 = vpack.c.b16 %v357, %v356
  %v474 = vpack.c.b16 %v359, %v358
  %v475 = vpack.c.b16 %v361, %v360
  %v476 = vpack.c.b16 %v363, %v362
  %v477 = vpack.c.b16 %v365, %v364
  %v478 = vpack.c.b16 %v367, %v366
  %v479 = vpack.c.b16 %v369, %v368
  %v480 = vpack.c.b16 %v371, %v370
  %v481 = vpack.c.b16 %v373, %v372
  %v482 = vpack.c.b16 %v375, %v374
  %v483 = vpack.c.b16 %v377, %v376
  %v484 = vpack.c.b16 %v379, %v378
  %v485 = vpack.c.b16 %v381, %v380
  %v486 = vpack.c.b16 %v383, %v382
  %v487 = vpack.c.b16 %v385, %v384
  %v488 = vpack.c.b16 %v387, %v386
  %v489 = vpack.c.b16 %v389, %v388
  %v490 = vpack.c.b16 %v391, %v390
  %v491 = vpack.c.b16 %v393, %v392
  %v492 = vpack.c.b16 %v395, %v394
  %v493 = vpack.c.b16 %v397, %v396
  %v494 = vpack.c.b16 %v399, %v398
  %v495 = vpack.c.b16 %v401, %v400
  %v496 = vpack.c.b16 %v403, %v402
  %v497 = vpack.c.b16 %v405, %v404
  %v498 = vpack.c.b16 %v407, %v406
  %v499 = vpack.c.b16 %v409, %v408
  %v500 = vpack.c.b16 %v411, %v410
  %v501 = vpack.c.b16 %v413, %v412
  %v502 = vpack.c.b16 %v415, %v414
  %v503 = vpack.c.b16 %v417, %v416
  %v504 = vpack.c.b16 %v419, %v418
  %v505 = vpack.c.b16 %v421, %v420
  %v506 = vpack.c.b16 %v423, %v422
  %v507 = vpack.c.b16 %v425, %v424
  %v508 = vpack.c.b16 %v427, %v426
  %v509 = vpack.c.b16 %v429, %v428
  %v510 = vpack.c.b16 %v431, %v430
  %v511 = vpack.c.b16 %v433, %v432
  %v512 = vpack.c.b16 %v435, %v434
  %v513 = vpack.c.b16 %v437, %v436
  %v514 = vpack.c.b16 %v439, %v438
  %v515 = vpack.c.b16 %v441, %v440
  %v516 = vpack.c.b16 %v443, %v442
  %v517 = vpack.c.b16 %v445, %v444
  %v518 = vpack.c.b16 %v447, %v446
  %v519 = vpack.c.b16 %v449, %v448
  %v520 = vpack.c.b16 %v451, %v450
  %v521 = vpack.c.b16 %v453, %v452
  %v522 = vpack.c.b16 %v455, %v454
  %v523 = vpack.c.b16 %v457, %v456
  %v524 = vpack.c.b16 %v459, %v458
  %v525 = vpack.c.b16 %v461, %v460
  %590 = vmatpush.bf16.msra.mxu0 %v469
  %591 = vmatpush.bf16.msra.mxu0 %v468
  %592 = vmatpush.bf16.msra.mxu0 %v467
  %593 = vmatpush.bf16.msra.mxu0 %v466
  %594 = vmatpush.bf16.msra.mxu0 %v465
  %595 = vmatpush.bf16.msra.mxu0 %v464
  %596 = vmatpush.bf16.msra.mxu0 %v463
  %597 = vmatpush.bf16.msra.mxu0 %v462
  %598 = vmatmul.bf16.gmra.mxu0 %v195
  %v599 = vpop.f32.mrf.mxu0
  %v600 = vadd.f32 %v204, %v599
  %v601 = vpop.f32.mrf.mxu0
  %602 = vdwg.mxu0
  %603 = vmatpush.bf16.msra.mxu0 %v477
  %604 = vmatpush.bf16.msra.mxu0 %v476
  %605 = vmatpush.bf16.msra.mxu0 %v475
  %606 = vmatpush.bf16.msra.mxu0 %v474
  %607 = vmatpush.bf16.msra.mxu0 %v473
  %608 = vmatpush.bf16.msra.mxu0 %v472
  %609 = vmatpush.bf16.msra.mxu0 %v471
  %610 = vmatpush.bf16.msra.mxu0 %v470
  %611 = vmatmul.bf16.gmra.mxu0 %v196
  %v612 = vpop.f32.mrf.mxu0
  %v613 = vadd.f32 %v600, %v612
  %v614 = vpop.f32.mrf.mxu0
  %615 = vdwg.mxu0
  %616 = vmatpush.bf16.msra.mxu0 %v485
  %617 = vmatpush.bf16.msra.mxu0 %v484
  %618 = vmatpush.bf16.msra.mxu0 %v483
  %619 = vmatpush.bf16.msra.mxu0 %v482
  %620 = vmatpush.bf16.msra.mxu0 %v481
  %621 = vmatpush.bf16.msra.mxu0 %v480
  %622 = vmatpush.bf16.msra.mxu0 %v479
  %623 = vmatpush.bf16.msra.mxu0 %v478
  %624 = vmatmul.bf16.gmra.mxu0 %v197
  %v625 = vpop.f32.mrf.mxu0
  %v626 = vadd.f32 %v613, %v625
  %v627 = vpop.f32.mrf.mxu0
  %628 = vdwg.mxu0
  %629 = vmatpush.bf16.msra.mxu0 %v493
  %630 = vmatpush.bf16.msra.mxu0 %v492
  %631 = vmatpush.bf16.msra.mxu0 %v491
  %632 = vmatpush.bf16.msra.mxu0 %v490
  %633 = vmatpush.bf16.msra.mxu0 %v489
  %634 = vmatpush.bf16.msra.mxu0 %v488
  %635 = vmatpush.bf16.msra.mxu0 %v487
  %636 = vmatpush.bf16.msra.mxu0 %v486
  %637 = vmatmul.bf16.gmra.mxu0 %v198
  %v638 = vpop.f32.mrf.mxu0
  %v639 = vadd.f32 %v626, %v638
  %v640 = vpop.f32.mrf.mxu0
  %641 = vdwg.mxu0
  %642 = vmatpush.bf16.msra.mxu0 %v501
  %643 = vmatpush.bf16.msra.mxu0 %v500
  %644 = vmatpush.bf16.msra.mxu0 %v499
  %645 = vmatpush.bf16.msra.mxu0 %v498
  %646 = vmatpush.bf16.msra.mxu0 %v497
  %647 = vmatpush.bf16.msra.mxu0 %v496
  %648 = vmatpush.bf16.msra.mxu0 %v495
  %649 = vmatpush.bf16.msra.mxu0 %v494
  %650 = vmatmul.bf16.gmra.mxu0 %v199
  %v651 = vpop.f32.mrf.mxu0
  %v652 = vadd.f32 %v639, %v651
  %v653 = vpop.f32.mrf.mxu0
  %654 = vdwg.mxu0
  %655 = vmatpush.bf16.msra.mxu0 %v509
  %656 = vmatpush.bf16.msra.mxu0 %v508
  %657 = vmatpush.bf16.msra.mxu0 %v507
  %658 = vmatpush.bf16.msra.mxu0 %v506
  %659 = vmatpush.bf16.msra.mxu0 %v505
  %660 = vmatpush.bf16.msra.mxu0 %v504
  %661 = vmatpush.bf16.msra.mxu0 %v503
  %662 = vmatpush.bf16.msra.mxu0 %v502
  %663 = vmatmul.bf16.gmra.mxu0 %v200
  %v664 = vpop.f32.mrf.mxu0
  %v665 = vadd.f32 %v652, %v664
  %v666 = vpop.f32.mrf.mxu0
  %667 = vdwg.mxu0
  %668 = vmatpush.bf16.msra.mxu0 %v517
  %669 = vmatpush.bf16.msra.mxu0 %v516
  %670 = vmatpush.bf16.msra.mxu0 %v515
  %671 = vmatpush.bf16.msra.mxu0 %v514
  %672 = vmatpush.bf16.msra.mxu0 %v513
  %673 = vmatpush.bf16.msra.mxu0 %v512
  %674 = vmatpush.bf16.msra.mxu0 %v511
  %675 = vmatpush.bf16.msra.mxu0 %v510
  %676 = vmatmul.bf16.gmra.mxu0 %v201
  %v677 = vpop.f32.mrf.mxu0
  %v678 = vadd.f32 %v665, %v677
  %v679 = vpop.f32.mrf.mxu0
  %680 = vdwg.mxu0
  %681 = vmatpush.bf16.msra.mxu0 %v525
  %682 = vmatpush.bf16.msra.mxu0 %v524
  %683 = vmatpush.bf16.msra.mxu0 %v523
  %684 = vmatpush.bf16.msra.mxu0 %v522
  %685 = vmatpush.bf16.msra.mxu0 %v521
  %686 = vmatpush.bf16.msra.mxu0 %v520
  %687 = vmatpush.bf16.msra.mxu0 %v519
  %688 = vmatpush.bf16.msra.mxu0 %v518
  %689 = vmatmul.bf16.gmra.mxu0 %v202
  %v690 = vpop.f32.mrf.mxu0
  %v691 = vadd.f32 %v678, %v690
  %v692 = vpop.f32.mrf.mxu0
  %693 = vdwg.mxu0
  %v694 = vmax.f32 %v691, 0.0
  %v695 = vpack.c.bf16 %v694, %v694
  %v697 = vperm.slane %v171, 0
  %v715 = vunpack.c.l.b16 %v155
  %v716 = vunpack.c.l.b16 %v156
  %v717 = vunpack.c.l.b16 %v157
  %v718 = vunpack.c.l.b16 %v158
  %v719 = vunpack.c.l.b16 %v159
  %v720 = vunpack.c.l.b16 %v160
  %v721 = vunpack.c.l.b16 %v161
  %v722 = vunpack.c.l.b16 %v162
  %v723 = vunpack.c.l.b16 %v163
  %v724 = vunpack.c.l.b16 %v164
  %v725 = vunpack.c.l.b16 %v165
  %v726 = vunpack.c.l.b16 %v166
  %v727 = vunpack.c.l.b16 %v167
  %v728 = vunpack.c.l.b16 %v168
  %v729 = vunpack.c.l.b16 %v169
  %v730 = vunpack.c.l.b16 %v170
  %v731 = vpack.c.b16 %v716, %v715
  %v732 = vpack.c.b16 %v718, %v717
  %v733 = vpack.c.b16 %v720, %v719
  %v734 = vpack.c.b16 %v722, %v721
  %v735 = vpack.c.b16 %v724, %v723
  %v736 = vpack.c.b16 %v726, %v725
  %v737 = vpack.c.b16 %v728, %v727
  %v738 = vpack.c.b16 %v730, %v729
  %747 = vmatpush.bf16.msra.mxu0 %v738
  %748 = vmatpush.bf16.msra.mxu0 %v737
  %749 = vmatpush.bf16.msra.mxu0 %v736
  %750 = vmatpush.bf16.msra.mxu0 %v735
  %751 = vmatpush.bf16.msra.mxu0 %v734
  %752 = vmatpush.bf16.msra.mxu0 %v733
  %753 = vmatpush.bf16.msra.mxu0 %v732
  %754 = vmatpush.bf16.msra.mxu0 %v731
  %755 = vmatmul.bf16.gmra.mxu0 %v695
  %v756 = vpop.f32.mrf.mxu0
  %v757 = vadd.f32 %v697, %v756
  %v758 = vpop.f32.mrf.mxu0
  %759 = vdwg.mxu0
  %760 = vst [vmem:[%s7] sm:$0x3] %v757
  %v761 = vld [vmem:[%s1] sm:$0xff]
  %v762 = vld [vmem:[%s1 + $0x8] sm:$0xff]
  %765 = vst [vmem:[#allocation1] ss:$4 sm:$0xff] %v761
  %s766 = scalar_lea.vmem [#allocation1], 32
  %767 = vst [vmem:[%s766] ss:$4 sm:$0xff] %v762
  %v768 = vld.sshfl [vmem:[#allocation1] sm:$0xff pattern:$0x73625140]
  %v769 = vld.sshfl [vmem:[#allocation1 + $0x8] sm:$0xff pattern:$0x73625140]
  %v770 = vld.sshfl [vmem:[#allocation1 + $0x10] sm:$0xff pattern:$0x73625140]
  %v771 = vld.sshfl [vmem:[#allocation1 + $0x18] sm:$0xff pattern:$0x73625140]
  %v772 = vld.sshfl [vmem:[#allocation1 + $0x20] sm:$0xff pattern:$0x73625140]
  %v773 = vld.sshfl [vmem:[#allocation1 + $0x28] sm:$0xff pattern:$0x73625140]
  %v774 = vld.sshfl [vmem:[#allocation1 + $0x30] sm:$0xff pattern:$0x73625140]
  %v775 = vld.sshfl [vmem:[#allocation1 + $0x38] sm:$0xff pattern:$0x73625140]
  %v784 = vpack.c.bf16 %v768, %v768
  %v785 = vpack.c.bf16 %v769, %v769
  %v786 = vpack.c.bf16 %v770, %v770
  %v787 = vpack.c.bf16 %v771, %v771
  %v788 = vpack.c.bf16 %v772, %v772
  %v789 = vpack.c.bf16 %v773, %v773
  %v790 = vpack.c.bf16 %v774, %v774
  %v791 = vpack.c.bf16 %v775, %v775
  %792 = vmatpush.bf16.msra.mxu0 %v469
  %793 = vmatpush.bf16.msra.mxu0 %v468
  %794 = vmatpush.bf16.msra.mxu0 %v467
  %795 = vmatpush.bf16.msra.mxu0 %v466
  %796 = vmatpush.bf16.msra.mxu0 %v465
  %797 = vmatpush.bf16.msra.mxu0 %v464
  %798 = vmatpush.bf16.msra.mxu0 %v463
  %799 = vmatpush.bf16.msra.mxu0 %v462
  %800 = vmatmul.bf16.gmra.mxu0 %v784
  %v801 = vpop.f32.mrf.mxu0
  %v802 = vadd.f32 %v204, %v801
  %v803 = vpop.f32.mrf.mxu0
  %804 = vdwg.mxu0
  %805 = vmatpush.bf16.msra.mxu0 %v477
  %806 = vmatpush.bf16.msra.mxu0 %v476
  %807 = vmatpush.bf16.msra.mxu0 %v475
  %808 = vmatpush.bf16.msra.mxu0 %v474
  %809 = vmatpush.bf16.msra.mxu0 %v473
  %810 = vmatpush.bf16.msra.mxu0 %v472
  %811 = vmatpush.bf16.msra.mxu0 %v471
  %812 = vmatpush.bf16.msra.mxu0 %v470
  %813 = vmatmul.bf16.gmra.mxu0 %v785
  %v814 = vpop.f32.mrf.mxu0
  %v815 = vadd.f32 %v802, %v814
  %v816 = vpop.f32.mrf.mxu0
  %817 = vdwg.mxu0
  %818 = vmatpush.bf16.msra.mxu0 %v485
  %819 = vmatpush.bf16.msra.mxu0 %v484
  %820 = vmatpush.bf16.msra.mxu0 %v483
  %821 = vmatpush.bf16.msra.mxu0 %v482
  %822 = vmatpush.bf16.msra.mxu0 %v481
  %823 = vmatpush.bf16.msra.mxu0 %v480
  %824 = vmatpush.bf16.msra.mxu0 %v479
  %825 = vmatpush.bf16.msra.mxu0 %v478
  %826 = vmatmul.bf16.gmra.mxu0 %v786
  %v827 = vpop.f32.mrf.mxu0
  %v828 = vadd.f32 %v815, %v827
  %v829 = vpop.f32.mrf.mxu0
  %830 = vdwg.mxu0
  %831 = vmatpush.bf16.msra.mxu0 %v493
  %832 = vmatpush.bf16.msra.mxu0 %v492
  %833 = vmatpush.bf16.msra.mxu0 %v491
  %834 = vmatpush.bf16.msra.mxu0 %v490
  %835 = vmatpush.bf16.msra.mxu0 %v489
  %836 = vmatpush.bf16.msra.mxu0 %v488
  %837 = vmatpush.bf16.msra.mxu0 %v487
  %838 = vmatpush.bf16.msra.mxu0 %v486
  %839 = vmatmul.bf16.gmra.mxu0 %v787
  %v840 = vpop.f32.mrf.mxu0
  %v841 = vadd.f32 %v828, %v840
  %v842 = vpop.f32.mrf.mxu0
  %843 = vdwg.mxu0
  %844 = vmatpush.bf16.msra.mxu0 %v501
  %845 = vmatpush.bf16.msra.mxu0 %v500
  %846 = vmatpush.bf16.msra.mxu0 %v499
  %847 = vmatpush.bf16.msra.mxu0 %v498
  %848 = vmatpush.bf16.msra.mxu0 %v497
  %849 = vmatpush.bf16.msra.mxu0 %v496
  %850 = vmatpush.bf16.msra.mxu0 %v495
  %851 = vmatpush.bf16.msra.mxu0 %v494
  %852 = vmatmul.bf16.gmra.mxu0 %v788
  %v853 = vpop.f32.mrf.mxu0
  %v854 = vadd.f32 %v841, %v853
  %v855 = vpop.f32.mrf.mxu0
  %856 = vdwg.mxu0
  %857 = vmatpush.bf16.msra.mxu0 %v509
  %858 = vmatpush.bf16.msra.mxu0 %v508
  %859 = vmatpush.bf16.msra.mxu0 %v507
  %860 = vmatpush.bf16.msra.mxu0 %v506
  %861 = vmatpush.bf16.msra.mxu0 %v505
  %862 = vmatpush.bf16.msra.mxu0 %v504
  %863 = vmatpush.bf16.msra.mxu0 %v503
  %864 = vmatpush.bf16.msra.mxu0 %v502
  %865 = vmatmul.bf16.gmra.mxu0 %v789
  %v866 = vpop.f32.mrf.mxu0
  %v867 = vadd.f32 %v854, %v866
  %v868 = vpop.f32.mrf.mxu0
  %869 = vdwg.mxu0
  %870 = vmatpush.bf16.msra.mxu0 %v517
  %871 = vmatpush.bf16.msra.mxu0 %v516
  %872 = vmatpush.bf16.msra.mxu0 %v515
  %873 = vmatpush.bf16.msra.mxu0 %v514
  %874 = vmatpush.bf16.msra.mxu0 %v513
  %875 = vmatpush.bf16.msra.mxu0 %v512
  %876 = vmatpush.bf16.msra.mxu0 %v511
  %877 = vmatpush.bf16.msra.mxu0 %v510
  %878 = vmatmul.bf16.gmra.mxu0 %v790
  %v879 = vpop.f32.mrf.mxu0
  %v880 = vadd.f32 %v867, %v879
  %v881 = vpop.f32.mrf.mxu0
  %882 = vdwg.mxu0
  %883 = vmatpush.bf16.msra.mxu0 %v525
  %884 = vmatpush.bf16.msra.mxu0 %v524
  %885 = vmatpush.bf16.msra.mxu0 %v523
  %886 = vmatpush.bf16.msra.mxu0 %v522
  %887 = vmatpush.bf16.msra.mxu0 %v521
  %888 = vmatpush.bf16.msra.mxu0 %v520
  %889 = vmatpush.bf16.msra.mxu0 %v519
  %890 = vmatpush.bf16.msra.mxu0 %v518
  %891 = vmatmul.bf16.gmra.mxu0 %v791
  %v892 = vpop.f32.mrf.mxu0
  %v893 = vadd.f32 %v880, %v892
  %v894 = vpop.f32.mrf.mxu0
  %895 = vdwg.mxu0
  %v896 = vmax.f32 %v893, 0.0
  %v897 = vpack.c.bf16 %v896, %v896
  %898 = vmatpush.bf16.msra.mxu0 %v738
  %899 = vmatpush.bf16.msra.mxu0 %v737
  %900 = vmatpush.bf16.msra.mxu0 %v736
  %901 = vmatpush.bf16.msra.mxu0 %v735
  %902 = vmatpush.bf16.msra.mxu0 %v734
  %903 = vmatpush.bf16.msra.mxu0 %v733
  %904 = vmatpush.bf16.msra.mxu0 %v732
  %905 = vmatpush.bf16.msra.mxu0 %v731
  %906 = vmatmul.bf16.gmra.mxu0 %v897
  %v907 = vpop.f32.mrf.mxu0
  %v908 = vadd.f32 %v697, %v907
  %v909 = vpop.f32.mrf.mxu0
  %910 = vdwg.mxu0
  %911 = vst [vmem:[%s7 + $0x2] sm:$0x3] %v908
  %v912 = vld [vmem:[%s2] sm:$0xff]
  %v913 = vld [vmem:[%s2 + $0x8] sm:$0xff]
  %916 = vst [vmem:[#allocation1] ss:$4 sm:$0xff] %v912
  %s917 = scalar_lea.vmem [#allocation1], 32
  %918 = vst [vmem:[%s917] ss:$4 sm:$0xff] %v913
  %v919 = vld.sshfl [vmem:[#allocation1] sm:$0xff pattern:$0x73625140]
  %v920 = vld.sshfl [vmem:[#allocation1 + $0x8] sm:$0xff pattern:$0x73625140]
  %v921 = vld.sshfl [vmem:[#allocation1 + $0x10] sm:$0xff pattern:$0x73625140]
  %v922 = vld.sshfl [vmem:[#allocation1 + $0x18] sm:$0xff pattern:$0x73625140]
  %v923 = vld.sshfl [vmem:[#allocation1 + $0x20] sm:$0xff pattern:$0x73625140]
  %v924 = vld.sshfl [vmem:[#allocation1 + $0x28] sm:$0xff pattern:$0x73625140]
  %v925 = vld.sshfl [vmem:[#allocation1 + $0x30] sm:$0xff pattern:$0x73625140]
  %v926 = vld.sshfl [vmem:[#allocation1 + $0x38] sm:$0xff pattern:$0x73625140]
  %v935 = vpack.c.bf16 %v919, %v919
  %v936 = vpack.c.bf16 %v920, %v920
  %v937 = vpack.c.bf16 %v921, %v921
  %v938 = vpack.c.bf16 %v922, %v922
  %v939 = vpack.c.bf16 %v923, %v923
  %v940 = vpack.c.bf16 %v924, %v924
  %v941 = vpack.c.bf16 %v925, %v925
  %v942 = vpack.c.bf16 %v926, %v926
  %943 = vmatpush.bf16.msra.mxu0 %v469
  %944 = vmatpush.bf16.msra.mxu0 %v468
  %945 = vmatpush.bf16.msra.mxu0 %v467
  %946 = vmatpush.bf16.msra.mxu0 %v466
  %947 = vmatpush.bf16.msra.mxu0 %v465
  %948 = vmatpush.bf16.msra.mxu0 %v464
  %949 = vmatpush.bf16.msra.mxu0 %v463
  %950 = vmatpush.bf16.msra.mxu0 %v462
  %951 = vmatmul.bf16.gmra.mxu0 %v935
  %v952 = vpop.f32.mrf.mxu0
  %v953 = vadd.f32 %v204, %v952
  %v954 = vpop.f32.mrf.mxu0
  %955 = vdwg.mxu0
  %956 = vmatpush.bf16.msra.mxu0 %v477
  %957 = vmatpush.bf16.msra.mxu0 %v476
  %958 = vmatpush.bf16.msra.mxu0 %v475
  %959 = vmatpush.bf16.msra.mxu0 %v474
  %960 = vmatpush.bf16.msra.mxu0 %v473
  %961 = vmatpush.bf16.msra.mxu0 %v472
  %962 = vmatpush.bf16.msra.mxu0 %v471
  %963 = vmatpush.bf16.msra.mxu0 %v470
  %964 = vmatmul.bf16.gmra.mxu0 %v936
  %v965 = vpop.f32.mrf.mxu0
  %v966 = vadd.f32 %v953, %v965
  %v967 = vpop.f32.mrf.mxu0
  %968 = vdwg.mxu0
  %969 = vmatpush.bf16.msra.mxu0 %v485
  %970 = vmatpush.bf16.msra.mxu0 %v484
  %971 = vmatpush.bf16.msra.mxu0 %v483
  %972 = vmatpush.bf16.msra.mxu0 %v482
  %973 = vmatpush.bf16.msra.mxu0 %v481
  %974 = vmatpush.bf16.msra.mxu0 %v480
  %975 = vmatpush.bf16.msra.mxu0 %v479
  %976 = vmatpush.bf16.msra.mxu0 %v478
  %977 = vmatmul.bf16.gmra.mxu0 %v937
  %v978 = vpop.f32.mrf.mxu0
  %v979 = vadd.f32 %v966, %v978
  %v980 = vpop.f32.mrf.mxu0
  %981 = vdwg.mxu0
  %982 = vmatpush.bf16.msra.mxu0 %v493
  %983 = vmatpush.bf16.msra.mxu0 %v492
  %984 = vmatpush.bf16.msra.mxu0 %v491
  %985 = vmatpush.bf16.msra.mxu0 %v490
  %986 = vmatpush.bf16.msra.mxu0 %v489
  %987 = vmatpush.bf16.msra.mxu0 %v488
  %988 = vmatpush.bf16.msra.mxu0 %v487
  %989 = vmatpush.bf16.msra.mxu0 %v486
  %990 = vmatmul.bf16.gmra.mxu0 %v938
  %v991 = vpop.f32.mrf.mxu0
  %v992 = vadd.f32 %v979, %v991
  %v993 = vpop.f32.mrf.mxu0
  %994 = vdwg.mxu0
  %995 = vmatpush.bf16.msra.mxu0 %v501
  %996 = vmatpush.bf16.msra.mxu0 %v500
  %997 = vmatpush.bf16.msra.mxu0 %v499
  %998 = vmatpush.bf16.msra.mxu0 %v498
  %999 = vmatpush.bf16.msra.mxu0 %v497
  %1000 = vmatpush.bf16.msra.mxu0 %v496
  %1001 = vmatpush.bf16.msra.mxu0 %v495
  %1002 = vmatpush.bf16.msra.mxu0 %v494
  %1003 = vmatmul.bf16.gmra.mxu0 %v939
  %v1004 = vpop.f32.mrf.mxu0
  %v1005 = vadd.f32 %v992, %v1004
  %v1006 = vpop.f32.mrf.mxu0
  %1007 = vdwg.mxu0
  %1008 = vmatpush.bf16.msra.mxu0 %v509
  %1009 = vmatpush.bf16.msra.mxu0 %v508
  %1010 = vmatpush.bf16.msra.mxu0 %v507
  %1011 = vmatpush.bf16.msra.mxu0 %v506
  %1012 = vmatpush.bf16.msra.mxu0 %v505
  %1013 = vmatpush.bf16.msra.mxu0 %v504
  %1014 = vmatpush.bf16.msra.mxu0 %v503
  %1015 = vmatpush.bf16.msra.mxu0 %v502
  %1016 = vmatmul.bf16.gmra.mxu0 %v940
  %v1017 = vpop.f32.mrf.mxu0
  %v1018 = vadd.f32 %v1005, %v1017
  %v1019 = vpop.f32.mrf.mxu0
  %1020 = vdwg.mxu0
  %1021 = vmatpush.bf16.msra.mxu0 %v517
  %1022 = vmatpush.bf16.msra.mxu0 %v516
  %1023 = vmatpush.bf16.msra.mxu0 %v515
  %1024 = vmatpush.bf16.msra.mxu0 %v514
  %1025 = vmatpush.bf16.msra.mxu0 %v513
  %1026 = vmatpush.bf16.msra.mxu0 %v512
  %1027 = vmatpush.bf16.msra.mxu0 %v511
  %1028 = vmatpush.bf16.msra.mxu0 %v510
  %1029 = vmatmul.bf16.gmra.mxu0 %v941
  %v1030 = vpop.f32.mrf.mxu0
  %v1031 = vadd.f32 %v1018, %v1030
  %v1032 = vpop.f32.mrf.mxu0
  %1033 = vdwg.mxu0
  %1034 = vmatpush.bf16.msra.mxu0 %v525
  %1035 = vmatpush.bf16.msra.mxu0 %v524
  %1036 = vmatpush.bf16.msra.mxu0 %v523
  %1037 = vmatpush.bf16.msra.mxu0 %v522
  %1038 = vmatpush.bf16.msra.mxu0 %v521
  %1039 = vmatpush.bf16.msra.mxu0 %v520
  %1040 = vmatpush.bf16.msra.mxu0 %v519
  %1041 = vmatpush.bf16.msra.mxu0 %v518
  %1042 = vmatmul.bf16.gmra.mxu0 %v942
  %v1043 = vpop.f32.mrf.mxu0
  %v1044 = vadd.f32 %v1031, %v1043
  %v1045 = vpop.f32.mrf.mxu0
  %1046 = vdwg.mxu0
  %v1047 = vmax.f32 %v1044, 0.0
  %v1048 = vpack.c.bf16 %v1047, %v1047
  %1049 = vmatpush.bf16.msra.mxu0 %v738
  %1050 = vmatpush.bf16.msra.mxu0 %v737
  %1051 = vmatpush.bf16.msra.mxu0 %v736
  %1052 = vmatpush.bf16.msra.mxu0 %v735
  %1053 = vmatpush.bf16.msra.mxu0 %v734
  %1054 = vmatpush.bf16.msra.mxu0 %v733
  %1055 = vmatpush.bf16.msra.mxu0 %v732
  %1056 = vmatpush.bf16.msra.mxu0 %v731
  %1057 = vmatmul.bf16.gmra.mxu0 %v1048
  %v1058 = vpop.f32.mrf.mxu0
  %v1059 = vadd.f32 %v697, %v1058
  %v1060 = vpop.f32.mrf.mxu0
  %1061 = vdwg.mxu0
  %1062 = vst [vmem:[%s7 + $0x4] sm:$0x3] %v1059
  // Predicated region
  $region30: #{_triplet_forward_impl.1} parent=0 // pred_check
    _
  $region31: #{_triplet_forward_impl.1} parent=0 // pred_check_branch
    %1064 = sbr.rel (0) target = $region33
  $region32: #{_triplet_forward_impl.1} parent=0 // pred_region
    _
  $region33: #{_triplet_forward_impl.1} parent=0 // pred_fallthru
    _
  // Predicated region
  $region34: #{_triplet_forward_impl.1} parent=0 // pred_check
    _
  $region35: #{_triplet_forward_impl.1} parent=0 // pred_check_branch
    %1066 = sbr.rel (0) target = $region37
  $region36: #{_triplet_forward_impl.1} parent=0 // pred_region
    _
  $region37: #{_triplet_forward_impl.1} parent=0 // pred_fallthru
    _

</llo_original>
